<compile_context>
chip_gen: v7x
topology: tpu7x:2x2x1
jax: 0.10.0
libtpu: 0.0.40
codegen_flags: <defaults>
</compile_context>

<pallas_src>
import functools

import jax
import jax.numpy as jnp
from jax import lax
from jax.experimental import pallas as pl
from jax.experimental.pallas import tpu as pltpu


def _l2_normalize_rows(v, eps=1e-12):
    # matches torch.nn.functional.normalize(v, dim=1): v / max(||v||_2, eps)
    n = jnp.sqrt(jnp.sum(v * v, axis=1, keepdims=True))
    return v / jnp.maximum(n, eps)


def memory_kernel(x_ref, w_ref, b_ref, slots_ref, aud_ref, loss_ref, *,
                  radius, n_slot, batch):
    i = pl.program_id(0)

    x = x_ref[...]                       # (bt, D)      f32
    w = w_ref[...]                       # (D, 512)     bf16 (pre-cast in wrapper)
    b = b_ref[...]                       # (1, 512)     f32
    slots = slots_ref[...]               # (S_pad, 512) f32, zero-padded rows

    bt = x.shape[0]
    s_pad = slots.shape[0]

    # ---- Linear embed: bf16 on the MXU, f32 accumulate --------------------
    embd = jnp.dot(x.astype(jnp.bfloat16), w,
                   preferred_element_type=jnp.float32) + b               # (bt, 512)

    # ---- L2 normalize (f32; zero padded slot rows stay zero) --------------
    slots_n = _l2_normalize_rows(slots)                                   # (S_pad, 512)
    embd_n = _l2_normalize_rows(embd)                                     # (bt, 512)

    # Single shared transpose of slots_n, reused by both sim and gram matmuls.
    slots_n_t = slots_n.T.astype(jnp.bfloat16)                            # (512, S_pad)

    # ---- slot similarity ---------------------------------------------------
    sim = jnp.dot(embd_n.astype(jnp.bfloat16), slots_n_t,
                  preferred_element_type=jnp.float32)                     # (bt, S_pad)

    # ---- softmax(radius * sim) over the valid (non-padded) slot columns ----
    logits = radius * sim
    if radius > 64.0:
        # static guard: sim is a cosine in [-1, 1]; max-subtraction only needed
        # when radius is large enough that exp(radius) could overflow f32.
        logits = logits - jnp.max(logits, axis=1, keepdims=True)
    valid_slot = lax.broadcasted_iota(jnp.int32, (bt, s_pad), 1) < n_slot
    exp_l = jnp.where(valid_slot, jnp.exp(logits), 0.0)
    attn = exp_l * pl.reciprocal(jnp.sum(exp_l, axis=1, keepdims=True),
                                 approx=True)                             # (bt, S_pad)

    # ---- read-out: aud = attn @ slots --------------------------------------
    aud = jnp.dot(attn.astype(jnp.bfloat16), slots.astype(jnp.bfloat16),
                  preferred_element_type=jnp.float32)                     # (bt, 512)
    aud_ref[...] = aud

    # ---- reconstruction-loss partial sum for this batch tile ---------------
    eps = 1e-8
    num = jnp.sum(aud * x, axis=1, keepdims=True)                         # (bt, 1)
    na = jnp.sqrt(jnp.sum(aud * aud, axis=1, keepdims=True))
    nx = jnp.sqrt(jnp.sum(x * x, axis=1, keepdims=True))
    cos = num / jnp.maximum(na * nx, eps)
    row = lax.broadcasted_iota(jnp.int32, (bt, 1), 0) + i * bt
    recon = jnp.where(row < batch, jnp.abs(1.0 - cos), 0.0)               # (bt, 1)
    recon_sum = jnp.sum(recon, axis=0, keepdims=True)                     # (1, 1)

    # Pack scalars into one lane-dense (8,128) tile per batch tile:
    #   [0,0] = recon partial-sum, [0,1] = contrastive loss (first tile only).
    sub8 = lax.broadcasted_iota(jnp.int32, (8, 128), 0)
    lane8 = lax.broadcasted_iota(jnp.int32, (8, 128), 1)
    loss_ref[...] = jnp.where((sub8 == 0) & (lane8 == 0), recon_sum, 0.0)[None]

    # ---- contrastive loss: batch-independent, compute once (tile 0 only) ---
    @pl.when(i == 0)
    def _():
        gram = jnp.dot(slots_n.astype(jnp.bfloat16), slots_n_t,
                       preferred_element_type=jnp.float32)                # (S_pad, S_pad)
        r = lax.broadcasted_iota(jnp.int32, (s_pad, s_pad), 0)
        c = lax.broadcasted_iota(jnp.int32, (s_pad, s_pad), 1)
        eye = ((r == c) & (r < n_slot)).astype(jnp.float32)               # masked identity
        contr = 0.5 * jnp.sum(
            jnp.sum(jnp.abs(eye - gram), axis=1, keepdims=True),
            axis=0, keepdims=True)                                        # (1, 1)
        loss_ref[...] = loss_ref[...] + jnp.where(
            (sub8 == 0) & (lane8 == 1), contr, 0.0)[None]


def memory_forward(x, w_t, bias, slots, *, radius=16.0, inference=False):
    """x: (B, D) f32, w_t: (D, 512) f32 (Linear weight pre-transposed),
    bias: (512,) f32, slots: (n_slot, 512) f32."""
    B, D = x.shape
    S, M = slots.shape  # M == 512

    # Lane-dense slot padding (e.g. 112 -> 128); padded rows masked in-kernel.
    s_pad = ((S + 127) // 128) * 128
    slots_p = jnp.pad(slots, ((0, s_pad - S), (0, 0)))

    # Batch tiling: up to 128 rows per tile (fills MXU rows), multiple of 8.
    b_tile = min(128, ((B + 7) // 8) * 8)
    n_tiles = (B + b_tile - 1) // b_tile
    b_pad = n_tiles * b_tile
    x_p = jnp.pad(x, ((0, b_pad - B), (0, 0)))

    kernel = functools.partial(memory_kernel, radius=float(radius),
                               n_slot=S, batch=B)

    aud_p, losses = pl.pallas_call(
        kernel,
        grid=(n_tiles,),
        in_specs=[
            pl.BlockSpec((b_tile, D), lambda i: (i, 0)),        # x tile
            pl.BlockSpec((D, M), lambda i: (0, 0)),             # weight (resident)
            pl.BlockSpec((1, M), lambda i: (0, 0)),             # bias (resident)
            pl.BlockSpec((s_pad, M), lambda i: (0, 0)),         # slots (resident)
        ],
        out_specs=(
            pl.BlockSpec((b_tile, M), lambda i: (i, 0)),        # aud tile
            pl.BlockSpec((1, 8, 128), lambda i: (i, 0, 0)),     # packed losses
        ),
        out_shape=(
            jax.ShapeDtypeStruct((b_pad, M), jnp.float32),
            jax.ShapeDtypeStruct((n_tiles, 8, 128), jnp.float32),
        ),
        compiler_params=pltpu.CompilerParams(
            dimension_semantics=("parallel",)),
    )(x_p, w_t.astype(jnp.bfloat16), bias.reshape(1, M), slots_p)

    aud = aud_p[:B]
    if inference:
        return aud
    recon = jnp.sum(losses[:, 0, 0]) / B       # mean over the true batch
    contr = losses[0, 0, 1]
    return aud, recon, contr


def memory_forward_ref(x, w_t, bias, slots, *, radius=16.0):
    """Pure-JAX f32 reference (mirrors the PyTorch forward)."""
    hp = lax.Precision.HIGHEST
    embd = jnp.dot(x, w_t, precision=hp) + bias[None, :]
    slots_n = _l2_normalize_rows(slots)
    embd_n = _l2_normalize_rows(embd)
    sim = jnp.dot(embd_n, slots_n.T, precision=hp)
    attn = jax.nn.softmax(radius * sim, axis=1)
    aud = jnp.dot(attn, slots, precision=hp)
    gram = jnp.dot(slots_n, slots_n.T, precision=hp)
    contr = 0.5 * jnp.sum(jnp.abs(jnp.eye(slots.shape[0]) - gram))
    num = jnp.sum(aud * x, axis=1)
    na = jnp.sqrt(jnp.sum(aud * aud, axis=1))
    nx = jnp.sqrt(jnp.sum(x * x, axis=1))
    cos = num / jnp.maximum(na * nx, 1e-8)
    recon = jnp.mean(jnp.abs(1.0 - cos))
    return aud, recon, contr


if __name__ == "__main__":
    # Module hyper-params (dim must equal 512 for the recon-loss path of the
    # original module to be shape-valid, since self.value is hardcoded to 512).
    B, DIM, N_SLOT, RADIUS = 8, 512, 112, 16.0

    key = jax.random.PRNGKey(0)
    k_x, k_val, k_w, k_b = jax.random.split(key, 4)

    # deterministic synthetic parameters (shapes from Memory.__init__)
    x = jax.random.normal(k_x, (B, DIM), dtype=jnp.float32)              # input value
    slots = 0.5 * jax.random.normal(k_val, (N_SLOT, 512), jnp.float32)   # nn.init.normal_(0, 0.5)
    bound = 1.0 / jnp.sqrt(DIM)
    w = jax.random.uniform(k_w, (512, DIM), jnp.float32, -bound, bound)  # Linear weight (out, in)
    bias = jax.random.uniform(k_b, (512,), jnp.float32, -bound, bound)   # Linear bias
    w_t = w.T  # (DIM, 512) so the kernel computes x @ W^T + b as in F.linear

    aud, recon, contr = jax.block_until_ready(
        memory_forward(x, w_t, bias, slots, radius=RADIUS, inference=False))

    aud_ref, recon_ref, contr_ref = memory_forward_ref(
        x, w_t, bias, slots, radius=RADIUS)

    assert aud.shape == (B, 512) and aud.dtype == jnp.float32
    assert jnp.max(jnp.abs(aud - aud_ref)) < 1e-2, "aud mismatch"
    assert jnp.abs(recon - recon_ref) < 1e-2, "recon_loss mismatch"
    assert jnp.abs(contr - contr_ref) / (jnp.abs(contr_ref) + 1e-6) < 1e-2, "contrastive_loss mismatch"

    print("KERNEL_OK")
</pallas_src>

<mosaic_0001>
module attributes {stable_mosaic.version = 11 : i64} {
  func.func @memory_kernel(%arg0: i32, %arg1: memref<8x512xf32, #tpu.memory_space<vmem>>, %arg2: memref<512x512xbf16, #tpu.memory_space<vmem>>, %arg3: memref<1x512xf32, #tpu.memory_space<vmem>>, %arg4: memref<128x512xf32, #tpu.memory_space<vmem>>, %arg5: memref<8x512xf32, #tpu.memory_space<vmem>>, %arg6: memref<1x8x128xf32, #tpu.memory_space<vmem>>) attributes {dimension_semantics = [#tpu.dimension_semantics<parallel>], iteration_bounds = array<i64: 1>, scalar_prefetch = 0 : i64, scratch_operands = 0 : i64, tpu.core_type = #tpu.core_type<tc>, window_params = [{transform_indices = @transform_0, window_bounds = array<i64: 8, 512>}, {pipeline_mode = #tpu.pipeline_mode<synchronous>, transform_indices = @transform_1, window_bounds = array<i64: 512, 512>}, {pipeline_mode = #tpu.pipeline_mode<synchronous>, transform_indices = @transform_2, window_bounds = array<i64: 1, 512>}, {pipeline_mode = #tpu.pipeline_mode<synchronous>, transform_indices = @transform_3, window_bounds = array<i64: 128, 512>}, {transform_indices = @transform_4, window_bounds = array<i64: 8, 512>}, {transform_indices = @transform_5, window_bounds = array<i64: 1, 8, 128>}]} {
    %c0 = arith.constant 0 : index
    %c0_0 = arith.constant 0 : index
    %0 = vector.load %arg1[%c0, %c0_0] : memref<8x512xf32, #tpu.memory_space<vmem>>, vector<8x512xf32>
    %c0_1 = arith.constant 0 : index
    %c0_2 = arith.constant 0 : index
    %1 = vector.load %arg2[%c0_1, %c0_2] : memref<512x512xbf16, #tpu.memory_space<vmem>>, vector<512x512xbf16>
    %c0_3 = arith.constant 0 : index
    %c0_4 = arith.constant 0 : index
    %2 = vector.load %arg3[%c0_3, %c0_4] : memref<1x512xf32, #tpu.memory_space<vmem>>, vector<1x512xf32>
    %c0_5 = arith.constant 0 : index
    %c0_6 = arith.constant 0 : index
    %3 = vector.load %arg4[%c0_5, %c0_6] : memref<128x512xf32, #tpu.memory_space<vmem>>, vector<128x512xf32>
    %4 = arith.truncf %0 : vector<8x512xf32> to vector<8x512xbf16>
    %cst = arith.constant dense<0.000000e+00> : vector<8x512xf32>
    %5 = tpu.matmul %4, %1, %cst {dimension_numbers = #tpu.dot_dimension_numbers<[1], [0], [0], [1], [0, 0, 1, 1], [], []>} : vector<8x512xbf16>, vector<512x512xbf16>, vector<8x512xf32> -> vector<8x512xf32>
    %6 = vector.broadcast %2 : vector<1x512xf32> to vector<8x512xf32>
    %7 = arith.addf %5, %6 : vector<8x512xf32>
    %8 = arith.mulf %3, %3 : vector<128x512xf32>
    %cst_7 = arith.constant dense<0.000000e+00> : vector<128xf32>
    %9 = vector.multi_reduction <add>, %8, %cst_7 [1] : vector<128x512xf32> to vector<128xf32>
    %10 = vector.shape_cast %9 : vector<128xf32> to vector<128x1xf32>
    %11 = math.sqrt %10 : vector<128x1xf32>
    %cst_8 = arith.constant 9.99999996E-13 : f32
    %12 = vector.broadcast %cst_8 : f32 to vector<128x1xf32>
    %13 = arith.maximumf %11, %12 : vector<128x1xf32>
    %14 = vector.broadcast %13 : vector<128x1xf32> to vector<128x512xf32>
    %15 = arith.divf %3, %14 : vector<128x512xf32>
    %16 = arith.mulf %7, %7 : vector<8x512xf32>
    %cst_9 = arith.constant dense<0.000000e+00> : vector<8xf32>
    %17 = vector.multi_reduction <add>, %16, %cst_9 [1] : vector<8x512xf32> to vector<8xf32>
    %18 = vector.shape_cast %17 : vector<8xf32> to vector<8x1xf32>
    %19 = math.sqrt %18 : vector<8x1xf32>
    %cst_10 = arith.constant 9.99999996E-13 : f32
    %20 = vector.broadcast %cst_10 : f32 to vector<8x1xf32>
    %21 = arith.maximumf %19, %20 : vector<8x1xf32>
    %22 = vector.broadcast %21 : vector<8x1xf32> to vector<8x512xf32>
    %23 = arith.divf %7, %22 : vector<8x512xf32>
    %24 = tpu.transpose %15, [1, 0] : vector<128x512xf32> -> vector<512x128xf32>
    %25 = arith.truncf %24 : vector<512x128xf32> to vector<512x128xbf16>
    %26 = arith.truncf %23 : vector<8x512xf32> to vector<8x512xbf16>
    %cst_11 = arith.constant dense<0.000000e+00> : vector<8x128xf32>
    %27 = tpu.matmul %26, %25, %cst_11 {dimension_numbers = #tpu.dot_dimension_numbers<[1], [0], [0], [1], [0, 0, 1, 1], [], []>} : vector<8x512xbf16>, vector<512x128xbf16>, vector<8x128xf32> -> vector<8x128xf32>
    %cst_12 = arith.constant 1.600000e+01 : f32
    %28 = vector.broadcast %cst_12 : f32 to vector<8x128xf32>
    %29 = arith.mulf %28, %27 : vector<8x128xf32>
    %30 = tpu.iota {dimensions = array<i32: 1>} : vector<8x128xi32>
    %c112_i32 = arith.constant 112 : i32
    %31 = vector.broadcast %c112_i32 : i32 to vector<8x128xi32>
    %32 = arith.cmpi slt, %30, %31 : vector<8x128xi32>
    %33 = math.exp %29 : vector<8x128xf32>
    %cst_13 = arith.constant 0.000000e+00 : f32
    %34 = vector.broadcast %cst_13 : f32 to vector<8x128xf32>
    %35 = arith.select %32, %33, %34 : vector<8x128xi1>, vector<8x128xf32>
    %cst_14 = arith.constant dense<0.000000e+00> : vector<8xf32>
    %36 = vector.multi_reduction <add>, %35, %cst_14 [1] : vector<8x128xf32> to vector<8xf32>
    %37 = vector.shape_cast %36 : vector<8xf32> to vector<8x1xf32>
    %38 = tpu.reciprocal %37 {approx = true} : vector<8x1xf32> -> vector<8x1xf32>
    %39 = vector.broadcast %38 : vector<8x1xf32> to vector<8x128xf32>
    %40 = arith.mulf %35, %39 : vector<8x128xf32>
    %41 = arith.truncf %40 : vector<8x128xf32> to vector<8x128xbf16>
    %42 = arith.truncf %3 : vector<128x512xf32> to vector<128x512xbf16>
    %cst_15 = arith.constant dense<0.000000e+00> : vector<8x512xf32>
    %43 = tpu.matmul %41, %42, %cst_15 {dimension_numbers = #tpu.dot_dimension_numbers<[1], [0], [0], [1], [0, 0, 1, 1], [], []>} : vector<8x128xbf16>, vector<128x512xbf16>, vector<8x512xf32> -> vector<8x512xf32>
    %c0_16 = arith.constant 0 : index
    %c0_17 = arith.constant 0 : index
    %44 = vector.load %arg5[%c0_16, %c0_17] : memref<8x512xf32, #tpu.memory_space<vmem>>, vector<8x512xf32>
    tpu.vector_store %arg5[%c0_16, %c0_17], %43 {strides = array<i32>} : memref<8x512xf32, #tpu.memory_space<vmem>>, vector<8x512xf32>,
    %45 = arith.mulf %43, %0 : vector<8x512xf32>
    %cst_18 = arith.constant dense<0.000000e+00> : vector<8xf32>
    %46 = vector.multi_reduction <add>, %45, %cst_18 [1] : vector<8x512xf32> to vector<8xf32>
    %47 = vector.shape_cast %46 : vector<8xf32> to vector<8x1xf32>
    %48 = arith.mulf %43, %43 : vector<8x512xf32>
    %cst_19 = arith.constant dense<0.000000e+00> : vector<8xf32>
    %49 = vector.multi_reduction <add>, %48, %cst_19 [1] : vector<8x512xf32> to vector<8xf32>
    %50 = vector.shape_cast %49 : vector<8xf32> to vector<8x1xf32>
    %51 = math.sqrt %50 : vector<8x1xf32>
    %52 = arith.mulf %0, %0 : vector<8x512xf32>
    %cst_20 = arith.constant dense<0.000000e+00> : vector<8xf32>
    %53 = vector.multi_reduction <add>, %52, %cst_20 [1] : vector<8x512xf32> to vector<8xf32>
    %54 = vector.shape_cast %53 : vector<8xf32> to vector<8x1xf32>
    %55 = math.sqrt %54 : vector<8x1xf32>
    %56 = arith.mulf %51, %55 : vector<8x1xf32>
    %cst_21 = arith.constant 9.99999993E-9 : f32
    %57 = vector.broadcast %cst_21 : f32 to vector<8x1xf32>
    %58 = arith.maximumf %56, %57 : vector<8x1xf32>
    %59 = arith.divf %47, %58 : vector<8x1xf32>
    %60 = tpu.iota {dimensions = array<i32: 0>} : vector<8x1xi32>
    %c8_i32 = arith.constant 8 : i32
    %61 = arith.muli %arg0, %c8_i32 : i32
    %62 = vector.broadcast %61 : i32 to vector<8x1xi32>
    %63 = arith.addi %60, %62 : vector<8x1xi32>
    %c8_i32_22 = arith.constant 8 : i32
    %64 = vector.broadcast %c8_i32_22 : i32 to vector<8x1xi32>
    %65 = arith.cmpi slt, %63, %64 : vector<8x1xi32>
    %cst_23 = arith.constant 1.000000e+00 : f32
    %66 = vector.broadcast %cst_23 : f32 to vector<8x1xf32>
    %67 = arith.subf %66, %59 : vector<8x1xf32>
    %68 = math.absf %67 : vector<8x1xf32>
    %cst_24 = arith.constant 0.000000e+00 : f32
    %69 = vector.broadcast %cst_24 : f32 to vector<8x1xf32>
    %70 = arith.select %65, %68, %69 : vector<8x1xi1>, vector<8x1xf32>
    %cst_25 = arith.constant dense<0.000000e+00> : vector<1xf32>
    %71 = vector.multi_reduction <add>, %70, %cst_25 [0] : vector<8x1xf32> to vector<1xf32>
    %72 = vector.shape_cast %71 : vector<1xf32> to vector<1x1xf32>
    %73 = tpu.iota {dimensions = array<i32: 0>} : vector<8x128xi32>
    %74 = tpu.iota {dimensions = array<i32: 1>} : vector<8x128xi32>
    %c0_i32 = arith.constant 0 : i32
    %75 = vector.broadcast %c0_i32 : i32 to vector<8x128xi32>
    %76 = arith.cmpi eq, %73, %75 : vector<8x128xi32>
    %c0_i32_26 = arith.constant 0 : i32
    %77 = vector.broadcast %c0_i32_26 : i32 to vector<8x128xi32>
    %78 = arith.cmpi eq, %74, %77 : vector<8x128xi32>
    %79 = arith.andi %76, %78 : vector<8x128xi1>
    %cst_27 = arith.constant 0.000000e+00 : f32
    %80 = vector.shape_cast %72 : vector<1x1xf32> to vector<1x1xf32>
    %81 = vector.broadcast %80 : vector<1x1xf32> to vector<8x128xf32>
    %82 = vector.broadcast %cst_27 : f32 to vector<8x128xf32>
    %83 = arith.select %79, %81, %82 : vector<8x128xi1>, vector<8x128xf32>
    %84 = vector.shape_cast %83 : vector<8x128xf32> to vector<1x8x128xf32>
    %c0_28 = arith.constant 0 : index
    %c0_29 = arith.constant 0 : index
    %c0_30 = arith.constant 0 : index
    %85 = vector.load %arg6[%c0_28, %c0_29, %c0_30] : memref<1x8x128xf32, #tpu.memory_space<vmem>>, vector<1x8x128xf32>
    tpu.vector_store %arg6[%c0_28, %c0_29, %c0_30], %84 {strides = array<i32>} : memref<1x8x128xf32, #tpu.memory_space<vmem>>, vector<1x8x128xf32>,
    %c0_i32_31 = arith.constant 0 : i32
    %86 = arith.cmpi eq, %arg0, %c0_i32_31 : i32
    %87 = arith.extui %86 : i1 to i32
    %c0_i32_32 = arith.constant 0 : i32
    %88 = arith.cmpi ne, %87, %c0_i32_32 : i32
    scf.if %88 {
      %89 = arith.truncf %15 : vector<128x512xf32> to vector<128x512xbf16>
      %cst_33 = arith.constant dense<0.000000e+00> : vector<128x128xf32>
      %90 = tpu.matmul %89, %25, %cst_33 {dimension_numbers = #tpu.dot_dimension_numbers<[1], [0], [0], [1], [0, 0, 1, 1], [], []>} : vector<128x512xbf16>, vector<512x128xbf16>, vector<128x128xf32> -> vector<128x128xf32>
      %91 = tpu.iota {dimensions = array<i32: 0>} : vector<128x128xi32>
      %92 = tpu.iota {dimensions = array<i32: 1>} : vector<128x128xi32>
      %93 = arith.cmpi eq, %91, %92 : vector<128x128xi32>
      %c112_i32_34 = arith.constant 112 : i32
      %94 = vector.broadcast %c112_i32_34 : i32 to vector<128x128xi32>
      %95 = arith.cmpi slt, %91, %94 : vector<128x128xi32>
      %96 = arith.andi %93, %95 : vector<128x128xi1>
      %97 = arith.extui %96 : vector<128x128xi1> to vector<128x128xi32>
      %98 = arith.sitofp %97 : vector<128x128xi32> to vector<128x128xf32>
      %99 = arith.subf %98, %90 : vector<128x128xf32>
      %100 = math.absf %99 : vector<128x128xf32>
      %cst_35 = arith.constant dense<0.000000e+00> : vector<128xf32>
      %101 = vector.multi_reduction <add>, %100, %cst_35 [1] : vector<128x128xf32> to vector<128xf32>
      %102 = vector.shape_cast %101 : vector<128xf32> to vector<128x1xf32>
      %cst_36 = arith.constant dense<0.000000e+00> : vector<1xf32>
      %103 = vector.multi_reduction <add>, %102, %cst_36 [0] : vector<128x1xf32> to vector<1xf32>
      %104 = vector.shape_cast %103 : vector<1xf32> to vector<1x1xf32>
      %cst_37 = arith.constant 5.000000e-01 : f32
      %105 = vector.broadcast %cst_37 : f32 to vector<1x1xf32>
      %106 = arith.mulf %105, %104 : vector<1x1xf32>
      %c0_38 = arith.constant 0 : index
      %c0_39 = arith.constant 0 : index
      %c0_40 = arith.constant 0 : index
      %107 = vector.load %arg6[%c0_38, %c0_39, %c0_40] : memref<1x8x128xf32, #tpu.memory_space<vmem>>, vector<1x8x128xf32>
      %c0_i32_41 = arith.constant 0 : i32
      %108 = vector.broadcast %c0_i32_41 : i32 to vector<8x128xi32>
      %109 = arith.cmpi eq, %73, %108 : vector<8x128xi32>
      %c1_i32 = arith.constant 1 : i32
      %110 = vector.broadcast %c1_i32 : i32 to vector<8x128xi32>
      %111 = arith.cmpi eq, %74, %110 : vector<8x128xi32>
      %112 = arith.andi %109, %111 : vector<8x128xi1>
      %cst_42 = arith.constant 0.000000e+00 : f32
      %113 = vector.shape_cast %106 : vector<1x1xf32> to vector<1x1xf32>
      %114 = vector.broadcast %113 : vector<1x1xf32> to vector<8x128xf32>
      %115 = vector.broadcast %cst_42 : f32 to vector<8x128xf32>
      %116 = arith.select %112, %114, %115 : vector<8x128xi1>, vector<8x128xf32>
      %117 = vector.shape_cast %116 : vector<8x128xf32> to vector<1x8x128xf32>
      %118 = arith.addf %107, %117 : vector<1x8x128xf32>
      %c0_43 = arith.constant 0 : index
      %c0_44 = arith.constant 0 : index
      %c0_45 = arith.constant 0 : index
      %119 = vector.load %arg6[%c0_43, %c0_44, %c0_45] : memref<1x8x128xf32, #tpu.memory_space<vmem>>, vector<1x8x128xf32>
      tpu.vector_store %arg6[%c0_43, %c0_44, %c0_45], %118 {strides = array<i32>} : memref<1x8x128xf32, #tpu.memory_space<vmem>>, vector<1x8x128xf32>,
    } else {
    }
    return
  }
  func.func @transform_0(%arg0: i32) -> (i32, i32) {
    %c0_i32 = arith.constant 0 : i32
    %c0_i32_0 = arith.constant 0 : i32
    return %arg0, %c0_i32 : i32, i32
  }
  func.func @transform_1(%arg0: i32) -> (i32, i32) {
    %c0_i32 = arith.constant 0 : i32
    %c0_i32_0 = arith.constant 0 : i32
    %c0_i32_1 = arith.constant 0 : i32
    return %c0_i32, %c0_i32_0 : i32, i32
  }
  func.func @transform_2(%arg0: i32) -> (i32, i32) {
    %c0_i32 = arith.constant 0 : i32
    %c0_i32_0 = arith.constant 0 : i32
    %c0_i32_1 = arith.constant 0 : i32
    return %c0_i32, %c0_i32_0 : i32, i32
  }
  func.func @transform_3(%arg0: i32) -> (i32, i32) {
    %c0_i32 = arith.constant 0 : i32
    %c0_i32_0 = arith.constant 0 : i32
    %c0_i32_1 = arith.constant 0 : i32
    return %c0_i32, %c0_i32_0 : i32, i32
  }
  func.func @transform_4(%arg0: i32) -> (i32, i32) {
    %c0_i32 = arith.constant 0 : i32
    %c0_i32_0 = arith.constant 0 : i32
    return %arg0, %c0_i32 : i32, i32
  }
  func.func @transform_5(%arg0: i32) -> (i32, i32, i32) {
    %c0_i32 = arith.constant 0 : i32
    %c0_i32_0 = arith.constant 0 : i32
    %c0_i32_1 = arith.constant 0 : i32
    return %arg0, %c0_i32, %c0_i32_0 : i32, i32, i32
  }
}

</mosaic_0001>

<llo_original>
// kernel: tpu_custom_call.1
$region0: #{tpu_custom_call.1}
  #allocation0 [shape = 'u32[]', space=smem, size = 0x4, offset = 0x4, fixed_abs, tag = 'smem constant byte address 0x4 - core index']
  #allocation1 [shape = 'u32[144,128]{1,0:T(1,128)}', space=vmem, size = 0x12000, scoped, tag = 'internal scratch']
  %s0 = inlined_call_operand.hbm [shape: f32[8,512], index: 0, kind: input, shape index: {}]
  %s1 = inlined_call_operand.hbm [shape: bf16[512,512], index: 1, kind: input, shape index: {}]
  %s2 = inlined_call_operand.vmem [shape: f32[1,512], index: 2, kind: input, shape index: {}]
  %s3 = inlined_call_operand.hbm [shape: f32[128,512], index: 3, kind: input, shape index: {}]
  %s4 = inlined_call_operand.hbm [shape: f32[8,512], index: 4, kind: output, shape index: {0}]
  %s5 = inlined_call_operand.hbm [shape: f32[1,8,128], index: 5, kind: output, shape index: {1}]
  %6 = xla_tuple %s4, %s5
  %s7 = sld [smem:[#allocation0]]
  $region50: #{tpu_custom_call.1} parent=0
    _
  %s9 = ssub.s32 1, %s7
  %s10 = scalar_select 0, %s9, %s7
  $region1: #{tpu_custom_call.1} parent=0
    #allocation2 [shape = 'u8[16384]{0}', space=vmem, size = 0x4000, scoped, tag = 'input window, operand 0, single buffered']
    #allocation3 [shape = 's32[1]{0}', space=sflag, size = 0x4, scoped, tag = 'scoped memory for tpu_custom_call.1']
    #allocation4 [shape = 's32[1]{0}', space=sflag, size = 0x4, scoped, tag = 'scoped memory for tpu_custom_call.1']
    #allocation5 [shape = 'u8[524288]{0}', space=vmem, size = 0x80000, scoped, tag = 'input window, operand 1, single buffered']
    #allocation6 [shape = 's32[1]{0}', space=sflag, size = 0x4, scoped, tag = 'scoped memory for tpu_custom_call.1']
    #allocation7 [shape = 'u8[262144]{0}', space=vmem, size = 0x40000, scoped, tag = 'input window, operand 3, single buffered']
    #allocation8 [shape = 'u8[16384]{0}', space=vmem, size = 0x4000, scoped, tag = 'output window, operand 0, single buffered']
    #allocation9 [shape = 'u8[4096]{0}', space=vmem, size = 0x1000, scoped, tag = 'output window, operand 1, single buffered']
    #allocation10 [shape = 's32[1]{0}', space=sflag, size = 0x4, scoped, tag = 'scoped memory for tpu_custom_call.1']
    %11 = vsyncpa [#allocation3], 0
    %12 = vsyncpa [#allocation6], 0
    %13 = vsyncpa [#allocation4], 0
    %14 = vsyncpa [#allocation10], 0
    // Predicated region
    $region2: #{tpu_custom_call.1} parent=1 // pred_check
      _
    $region3: #{tpu_custom_call.1} parent=1 // pred_check_branch
      %16 = sbr.rel (0) target = $region5
    $region4: #{tpu_custom_call.1} parent=1 // pred_region
      %s18 = ssub.s32 512, 512
      %19 = vsyncadd [#allocation3], %s18
      %s21 = sshll.u32 [#allocation2], 4
      %s22 = int_to_ptr.vmem [resolvable:$true] %s21
      %24 = dma.hbm_to_vmem [thread:$0]  %s0, 512, %s22, [#allocation3]
    $region5: #{tpu_custom_call.1} parent=1 // pred_fallthru
      _
    // Predicated region
    $region6: #{tpu_custom_call.1} parent=1 // pred_check
      _
    $region7: #{tpu_custom_call.1} parent=1 // pred_check_branch
      %26 = sbr.rel (0) target = $region9
    $region8: #{tpu_custom_call.1} parent=1 // pred_region
      %s28 = ssub.s32 16384, 16384
      %29 = vsyncadd [#allocation6], %s28
      %s30 = sshll.u32 [#allocation5], 4
      %s31 = int_to_ptr.vmem [resolvable:$true] %s30
      %36 = dma.hbm_to_vmem [thread:$0]  %s1, 16384, %s31, [#allocation6], 256, 256, 16
    $region9: #{tpu_custom_call.1} parent=1 // pred_fallthru
      _
    // Predicated region
    $region10: #{tpu_custom_call.1} parent=1 // pred_check
      _
    $region11: #{tpu_custom_call.1} parent=1 // pred_check_branch
      %38 = sbr.rel (0) target = $region13
    $region12: #{tpu_custom_call.1} parent=1 // pred_region
      _
    $region13: #{tpu_custom_call.1} parent=1 // pred_fallthru
      _
    // Predicated region
    $region14: #{tpu_custom_call.1} parent=1 // pred_check
      _
    $region15: #{tpu_custom_call.1} parent=1 // pred_check_branch
      %40 = sbr.rel (0) target = $region17
    $region16: #{tpu_custom_call.1} parent=1 // pred_region
      %s42 = ssub.s32 8192, 8192
      %43 = vsyncadd [#allocation6], %s42
      %s44 = sshll.u32 [#allocation7], 4
      %s45 = int_to_ptr.vmem [resolvable:$true] %s44
      %50 = dma.hbm_to_vmem [thread:$0]  %s3, 8192, %s45, [#allocation6], 512, 512, 32
    $region17: #{tpu_custom_call.1} parent=1 // pred_fallthru
      _
    // Predicated region
    $region18: #{tpu_custom_call.1} parent=1 // pred_check
      _
    $region19: #{tpu_custom_call.1} parent=1 // pred_check_branch
      %52 = sbr.rel (0) target = $region21
    $region20: #{tpu_custom_call.1} parent=1 // pred_region
      %53 = dma.done [#allocation3], 512
    $region21: #{tpu_custom_call.1} parent=1 // pred_fallthru
      _
    // Predicated region
    $region22: #{tpu_custom_call.1} parent=1 // pred_check
      _
    $region23: #{tpu_custom_call.1} parent=1 // pred_check_branch
      %55 = sbr.rel (0) target = $region25
    $region24: #{tpu_custom_call.1} parent=1 // pred_region
      %56 = dma.done [#allocation6], 16384
    $region25: #{tpu_custom_call.1} parent=1 // pred_fallthru
      _
    // Predicated region
    $region26: #{tpu_custom_call.1} parent=1 // pred_check
      _
    $region27: #{tpu_custom_call.1} parent=1 // pred_check_branch
      %58 = sbr.rel (0) target = $region29
    $region28: #{tpu_custom_call.1} parent=1 // pred_region
      %59 = dma.done [#allocation6], 8192
    $region29: #{tpu_custom_call.1} parent=1 // pred_fallthru
      _
    %v61 = vld [vmem:[#allocation2] sm:$0xff]
    %v62 = vld [vmem:[#allocation2 + $0x8] sm:$0xff]
    %v63 = vld [vmem:[#allocation2 + $0x10] sm:$0xff]
    %v64 = vld [vmem:[#allocation2 + $0x18] sm:$0xff]
    %v65 = vld [vmem:[#allocation5] sm:$0xff]
    %v66 = vld [vmem:[#allocation5 + $0x8] sm:$0xff]
    %v67 = vld [vmem:[#allocation5 + $0x10] sm:$0xff]
    %v68 = vld [vmem:[#allocation5 + $0x18] sm:$0xff]
    %v69 = vld [vmem:[#allocation5 + $0x20] sm:$0xff]
    %v70 = vld [vmem:[#allocation5 + $0x28] sm:$0xff]
    %v71 = vld [vmem:[#allocation5 + $0x30] sm:$0xff]
    %v72 = vld [vmem:[#allocation5 + $0x38] sm:$0xff]
    %v73 = vld [vmem:[#allocation5 + $0x40] sm:$0xff]
    %v74 = vld [vmem:[#allocation5 + $0x48] sm:$0xff]
    %v75 = vld [vmem:[#allocation5 + $0x50] sm:$0xff]
    %v76 = vld [vmem:[#allocation5 + $0x58] sm:$0xff]
    %v77 = vld [vmem:[#allocation5 + $0x60] sm:$0xff]
    %v78 = vld [vmem:[#allocation5 + $0x68] sm:$0xff]
    %v79 = vld [vmem:[#allocation5 + $0x70] sm:$0xff]
    %v80 = vld [vmem:[#allocation5 + $0x78] sm:$0xff]
    %v81 = vld [vmem:[#allocation5 + $0x80] sm:$0xff]
    %v82 = vld [vmem:[#allocation5 + $0x88] sm:$0xff]
    %v83 = vld [vmem:[#allocation5 + $0x90] sm:$0xff]
    %v84 = vld [vmem:[#allocation5 + $0x98] sm:$0xff]
    %v85 = vld [vmem:[#allocation5 + $0xa0] sm:$0xff]
    %v86 = vld [vmem:[#allocation5 + $0xa8] sm:$0xff]
    %v87 = vld [vmem:[#allocation5 + $0xb0] sm:$0xff]
    %v88 = vld [vmem:[#allocation5 + $0xb8] sm:$0xff]
    %v89 = vld [vmem:[#allocation5 + $0xc0] sm:$0xff]
    %v90 = vld [vmem:[#allocation5 + $0xc8] sm:$0xff]
    %v91 = vld [vmem:[#allocation5 + $0xd0] sm:$0xff]
    %v92 = vld [vmem:[#allocation5 + $0xd8] sm:$0xff]
    %v93 = vld [vmem:[#allocation5 + $0xe0] sm:$0xff]
    %v94 = vld [vmem:[#allocation5 + $0xe8] sm:$0xff]
    %v95 = vld [vmem:[#allocation5 + $0xf0] sm:$0xff]
    %v96 = vld [vmem:[#allocation5 + $0xf8] sm:$0xff]
    %v97 = vld [vmem:[#allocation5 + $0x100] sm:$0xff]
    %v98 = vld [vmem:[#allocation5 + $0x108] sm:$0xff]
    %v99 = vld [vmem:[#allocation5 + $0x110] sm:$0xff]
    %v100 = vld [vmem:[#allocation5 + $0x118] sm:$0xff]
    %v101 = vld [vmem:[#allocation5 + $0x120] sm:$0xff]
    %v102 = vld [vmem:[#allocation5 + $0x128] sm:$0xff]
    %v103 = vld [vmem:[#allocation5 + $0x130] sm:$0xff]
    %v104 = vld [vmem:[#allocation5 + $0x138] sm:$0xff]
    %v105 = vld [vmem:[#allocation5 + $0x140] sm:$0xff]
    %v106 = vld [vmem:[#allocation5 + $0x148] sm:$0xff]
    %v107 = vld [vmem:[#allocation5 + $0x150] sm:$0xff]
    %v108 = vld [vmem:[#allocation5 + $0x158] sm:$0xff]
    %v109 = vld [vmem:[#allocation5 + $0x160] sm:$0xff]
    %v110 = vld [vmem:[#allocation5 + $0x168] sm:$0xff]
    %v111 = vld [vmem:[#allocation5 + $0x170] sm:$0xff]
    %v112 = vld [vmem:[#allocation5 + $0x178] sm:$0xff]
    %v113 = vld [vmem:[#allocation5 + $0x180] sm:$0xff]
    %v114 = vld [vmem:[#allocation5 + $0x188] sm:$0xff]
    %v115 = vld [vmem:[#allocation5 + $0x190] sm:$0xff]
    %v116 = vld [vmem:[#allocation5 + $0x198] sm:$0xff]
    %v117 = vld [vmem:[#allocation5 + $0x1a0] sm:$0xff]
    %v118 = vld [vmem:[#allocation5 + $0x1a8] sm:$0xff]
    %v119 = vld [vmem:[#allocation5 + $0x1b0] sm:$0xff]
    %v120 = vld [vmem:[#allocation5 + $0x1b8] sm:$0xff]
    %v121 = vld [vmem:[#allocation5 + $0x1c0] sm:$0xff]
    %v122 = vld [vmem:[#allocation5 + $0x1c8] sm:$0xff]
    %v123 = vld [vmem:[#allocation5 + $0x1d0] sm:$0xff]
    %v124 = vld [vmem:[#allocation5 + $0x1d8] sm:$0xff]
    %v125 = vld [vmem:[#allocation5 + $0x1e0] sm:$0xff]
    %v126 = vld [vmem:[#allocation5 + $0x1e8] sm:$0xff]
    %v127 = vld [vmem:[#allocation5 + $0x1f0] sm:$0xff]
    %v128 = vld [vmem:[#allocation5 + $0x1f8] sm:$0xff]
    %v129 = vld [vmem:[#allocation5 + $0x200] sm:$0xff]
    %v130 = vld [vmem:[#allocation5 + $0x208] sm:$0xff]
    %v131 = vld [vmem:[#allocation5 + $0x210] sm:$0xff]
    %v132 = vld [vmem:[#allocation5 + $0x218] sm:$0xff]
    %v133 = vld [vmem:[#allocation5 + $0x220] sm:$0xff]
    %v134 = vld [vmem:[#allocation5 + $0x228] sm:$0xff]
    %v135 = vld [vmem:[#allocation5 + $0x230] sm:$0xff]
    %v136 = vld [vmem:[#allocation5 + $0x238] sm:$0xff]
    %v137 = vld [vmem:[#allocation5 + $0x240] sm:$0xff]
    %v138 = vld [vmem:[#allocation5 + $0x248] sm:$0xff]
    %v139 = vld [vmem:[#allocation5 + $0x250] sm:$0xff]
    %v140 = vld [vmem:[#allocation5 + $0x258] sm:$0xff]
    %v141 = vld [vmem:[#allocation5 + $0x260] sm:$0xff]
    %v142 = vld [vmem:[#allocation5 + $0x268] sm:$0xff]
    %v143 = vld [vmem:[#allocation5 + $0x270] sm:$0xff]
    %v144 = vld [vmem:[#allocation5 + $0x278] sm:$0xff]
    %v145 = vld [vmem:[#allocation5 + $0x280] sm:$0xff]
    %v146 = vld [vmem:[#allocation5 + $0x288] sm:$0xff]
    %v147 = vld [vmem:[#allocation5 + $0x290] sm:$0xff]
    %v148 = vld [vmem:[#allocation5 + $0x298] sm:$0xff]
    %v149 = vld [vmem:[#allocation5 + $0x2a0] sm:$0xff]
    %v150 = vld [vmem:[#allocation5 + $0x2a8] sm:$0xff]
    %v151 = vld [vmem:[#allocation5 + $0x2b0] sm:$0xff]
    %v152 = vld [vmem:[#allocation5 + $0x2b8] sm:$0xff]
    %v153 = vld [vmem:[#allocation5 + $0x2c0] sm:$0xff]
    %v154 = vld [vmem:[#allocation5 + $0x2c8] sm:$0xff]
    %v155 = vld [vmem:[#allocation5 + $0x2d0] sm:$0xff]
    %v156 = vld [vmem:[#allocation5 + $0x2d8] sm:$0xff]
    %v157 = vld [vmem:[#allocation5 + $0x2e0] sm:$0xff]
    %v158 = vld [vmem:[#allocation5 + $0x2e8] sm:$0xff]
    %v159 = vld [vmem:[#allocation5 + $0x2f0] sm:$0xff]
    %v160 = vld [vmem:[#allocation5 + $0x2f8] sm:$0xff]
    %v161 = vld [vmem:[#allocation5 + $0x300] sm:$0xff]
    %v162 = vld [vmem:[#allocation5 + $0x308] sm:$0xff]
    %v163 = vld [vmem:[#allocation5 + $0x310] sm:$0xff]
    %v164 = vld [vmem:[#allocation5 + $0x318] sm:$0xff]
    %v165 = vld [vmem:[#allocation5 + $0x320] sm:$0xff]
    %v166 = vld [vmem:[#allocation5 + $0x328] sm:$0xff]
    %v167 = vld [vmem:[#allocation5 + $0x330] sm:$0xff]
    %v168 = vld [vmem:[#allocation5 + $0x338] sm:$0xff]
    %v169 = vld [vmem:[#allocation5 + $0x340] sm:$0xff]
    %v170 = vld [vmem:[#allocation5 + $0x348] sm:$0xff]
    %v171 = vld [vmem:[#allocation5 + $0x350] sm:$0xff]
    %v172 = vld [vmem:[#allocation5 + $0x358] sm:$0xff]
    %v173 = vld [vmem:[#allocation5 + $0x360] sm:$0xff]
    %v174 = vld [vmem:[#allocation5 + $0x368] sm:$0xff]
    %v175 = vld [vmem:[#allocation5 + $0x370] sm:$0xff]
    %v176 = vld [vmem:[#allocation5 + $0x378] sm:$0xff]
    %v177 = vld [vmem:[#allocation5 + $0x380] sm:$0xff]
    %v178 = vld [vmem:[#allocation5 + $0x388] sm:$0xff]
    %v179 = vld [vmem:[#allocation5 + $0x390] sm:$0xff]
    %v180 = vld [vmem:[#allocation5 + $0x398] sm:$0xff]
    %v181 = vld [vmem:[#allocation5 + $0x3a0] sm:$0xff]
    %v182 = vld [vmem:[#allocation5 + $0x3a8] sm:$0xff]
    %v183 = vld [vmem:[#allocation5 + $0x3b0] sm:$0xff]
    %v184 = vld [vmem:[#allocation5 + $0x3b8] sm:$0xff]
    %v185 = vld [vmem:[#allocation5 + $0x3c0] sm:$0xff]
    %v186 = vld [vmem:[#allocation5 + $0x3c8] sm:$0xff]
    %v187 = vld [vmem:[#allocation5 + $0x3d0] sm:$0xff]
    %v188 = vld [vmem:[#allocation5 + $0x3d8] sm:$0xff]
    %v189 = vld [vmem:[#allocation5 + $0x3e0] sm:$0xff]
    %v190 = vld [vmem:[#allocation5 + $0x3e8] sm:$0xff]
    %v191 = vld [vmem:[#allocation5 + $0x3f0] sm:$0xff]
    %v192 = vld [vmem:[#allocation5 + $0x3f8] sm:$0xff]
    %v193 = vld [vmem:[%s2] sm:$0xf]
    %v194 = vld [vmem:[#allocation7] sm:$0xff]
    %v195 = vld [vmem:[#allocation7 + $0x8] sm:$0xff]
    %v196 = vld [vmem:[#allocation7 + $0x10] sm:$0xff]
    %v197 = vld [vmem:[#allocation7 + $0x18] sm:$0xff]
    %v198 = vld [vmem:[#allocation7 + $0x20] sm:$0xff]
    %v199 = vld [vmem:[#allocation7 + $0x28] sm:$0xff]
    %v200 = vld [vmem:[#allocation7 + $0x30] sm:$0xff]
    %v201 = vld [vmem:[#allocation7 + $0x38] sm:$0xff]
    %v202 = vld [vmem:[#allocation7 + $0x40] sm:$0xff]
    %v203 = vld [vmem:[#allocation7 + $0x48] sm:$0xff]
    %v204 = vld [vmem:[#allocation7 + $0x50] sm:$0xff]
    %v205 = vld [vmem:[#allocation7 + $0x58] sm:$0xff]
    %v206 = vld [vmem:[#allocation7 + $0x60] sm:$0xff]
    %v207 = vld [vmem:[#allocation7 + $0x68] sm:$0xff]
    %v208 = vld [vmem:[#allocation7 + $0x70] sm:$0xff]
    %v209 = vld [vmem:[#allocation7 + $0x78] sm:$0xff]
    %v210 = vld [vmem:[#allocation7 + $0x80] sm:$0xff]
    %v211 = vld [vmem:[#allocation7 + $0x88] sm:$0xff]
    %v212 = vld [vmem:[#allocation7 + $0x90] sm:$0xff]
    %v213 = vld [vmem:[#allocation7 + $0x98] sm:$0xff]
    %v214 = vld [vmem:[#allocation7 + $0xa0] sm:$0xff]
    %v215 = vld [vmem:[#allocation7 + $0xa8] sm:$0xff]
    %v216 = vld [vmem:[#allocation7 + $0xb0] sm:$0xff]
    %v217 = vld [vmem:[#allocation7 + $0xb8] sm:$0xff]
    %v218 = vld [vmem:[#allocation7 + $0xc0] sm:$0xff]
    %v219 = vld [vmem:[#allocation7 + $0xc8] sm:$0xff]
    %v220 = vld [vmem:[#allocation7 + $0xd0] sm:$0xff]
    %v221 = vld [vmem:[#allocation7 + $0xd8] sm:$0xff]
    %v222 = vld [vmem:[#allocation7 + $0xe0] sm:$0xff]
    %v223 = vld [vmem:[#allocation7 + $0xe8] sm:$0xff]
    %v224 = vld [vmem:[#allocation7 + $0xf0] sm:$0xff]
    %v225 = vld [vmem:[#allocation7 + $0xf8] sm:$0xff]
    %v226 = vld [vmem:[#allocation7 + $0x100] sm:$0xff]
    %v227 = vld [vmem:[#allocation7 + $0x108] sm:$0xff]
    %v228 = vld [vmem:[#allocation7 + $0x110] sm:$0xff]
    %v229 = vld [vmem:[#allocation7 + $0x118] sm:$0xff]
    %v230 = vld [vmem:[#allocation7 + $0x120] sm:$0xff]
    %v231 = vld [vmem:[#allocation7 + $0x128] sm:$0xff]
    %v232 = vld [vmem:[#allocation7 + $0x130] sm:$0xff]
    %v233 = vld [vmem:[#allocation7 + $0x138] sm:$0xff]
    %v234 = vld [vmem:[#allocation7 + $0x140] sm:$0xff]
    %v235 = vld [vmem:[#allocation7 + $0x148] sm:$0xff]
    %v236 = vld [vmem:[#allocation7 + $0x150] sm:$0xff]
    %v237 = vld [vmem:[#allocation7 + $0x158] sm:$0xff]
    %v238 = vld [vmem:[#allocation7 + $0x160] sm:$0xff]
    %v239 = vld [vmem:[#allocation7 + $0x168] sm:$0xff]
    %v240 = vld [vmem:[#allocation7 + $0x170] sm:$0xff]
    %v241 = vld [vmem:[#allocation7 + $0x178] sm:$0xff]
    %v242 = vld [vmem:[#allocation7 + $0x180] sm:$0xff]
    %v243 = vld [vmem:[#allocation7 + $0x188] sm:$0xff]
    %v244 = vld [vmem:[#allocation7 + $0x190] sm:$0xff]
    %v245 = vld [vmem:[#allocation7 + $0x198] sm:$0xff]
    %v246 = vld [vmem:[#allocation7 + $0x1a0] sm:$0xff]
    %v247 = vld [vmem:[#allocation7 + $0x1a8] sm:$0xff]
    %v248 = vld [vmem:[#allocation7 + $0x1b0] sm:$0xff]
    %v249 = vld [vmem:[#allocation7 + $0x1b8] sm:$0xff]
    %v250 = vld [vmem:[#allocation7 + $0x1c0] sm:$0xff]
    %v251 = vld [vmem:[#allocation7 + $0x1c8] sm:$0xff]
    %v252 = vld [vmem:[#allocation7 + $0x1d0] sm:$0xff]
    %v253 = vld [vmem:[#allocation7 + $0x1d8] sm:$0xff]
    %v254 = vld [vmem:[#allocation7 + $0x1e0] sm:$0xff]
    %v255 = vld [vmem:[#allocation7 + $0x1e8] sm:$0xff]
    %v256 = vld [vmem:[#allocation7 + $0x1f0] sm:$0xff]
    %v257 = vld [vmem:[#allocation7 + $0x1f8] sm:$0xff]
    %v258 = vpack.c.bf16 %v61, %v61
    %v259 = vpack.c.bf16 %v62, %v62
    %v260 = vpack.c.bf16 %v63, %v63
    %v261 = vpack.c.bf16 %v64, %v64
    %v263 = vlaneseq
    %v264 = vshrl.u32 %v263, 7
    %v265 = vsub.s32 0, %v264
    %v266 = vrot.slane %v193, %v265
    %v267 = vlaneseq
    %v268 = vshrl.u32 %v267, 7
    %v269 = vsub.s32 1, %v268
    %v270 = vrot.slane %v193, %v269
    %v271 = vlaneseq
    %v272 = vshrl.u32 %v271, 7
    %v273 = vsub.s32 2, %v272
    %v274 = vrot.slane %v193, %v273
    %v275 = vlaneseq
    %v276 = vshrl.u32 %v275, 7
    %v277 = vsub.s32 3, %v276
    %v278 = vrot.slane %v193, %v277
    %v411 = vunpack.c.l.b16 %v65
    %v412 = vunpack.c.h.b16 %v65
    %v413 = vunpack.c.l.b16 %v66
    %v414 = vunpack.c.h.b16 %v66
    %v415 = vunpack.c.l.b16 %v67
    %v416 = vunpack.c.h.b16 %v67
    %v417 = vunpack.c.l.b16 %v68
    %v418 = vunpack.c.h.b16 %v68
    %v419 = vunpack.c.l.b16 %v69
    %v420 = vunpack.c.h.b16 %v69
    %v421 = vunpack.c.l.b16 %v70
    %v422 = vunpack.c.h.b16 %v70
    %v423 = vunpack.c.l.b16 %v71
    %v424 = vunpack.c.h.b16 %v71
    %v425 = vunpack.c.l.b16 %v72
    %v426 = vunpack.c.h.b16 %v72
    %v427 = vunpack.c.l.b16 %v73
    %v428 = vunpack.c.h.b16 %v73
    %v429 = vunpack.c.l.b16 %v74
    %v430 = vunpack.c.h.b16 %v74
    %v431 = vunpack.c.l.b16 %v75
    %v432 = vunpack.c.h.b16 %v75
    %v433 = vunpack.c.l.b16 %v76
    %v434 = vunpack.c.h.b16 %v76
    %v435 = vunpack.c.l.b16 %v77
    %v436 = vunpack.c.h.b16 %v77
    %v437 = vunpack.c.l.b16 %v78
    %v438 = vunpack.c.h.b16 %v78
    %v439 = vunpack.c.l.b16 %v79
    %v440 = vunpack.c.h.b16 %v79
    %v441 = vunpack.c.l.b16 %v80
    %v442 = vunpack.c.h.b16 %v80
    %v443 = vunpack.c.l.b16 %v81
    %v444 = vunpack.c.h.b16 %v81
    %v445 = vunpack.c.l.b16 %v82
    %v446 = vunpack.c.h.b16 %v82
    %v447 = vunpack.c.l.b16 %v83
    %v448 = vunpack.c.h.b16 %v83
    %v449 = vunpack.c.l.b16 %v84
    %v450 = vunpack.c.h.b16 %v84
    %v451 = vunpack.c.l.b16 %v85
    %v452 = vunpack.c.h.b16 %v85
    %v453 = vunpack.c.l.b16 %v86
    %v454 = vunpack.c.h.b16 %v86
    %v455 = vunpack.c.l.b16 %v87
    %v456 = vunpack.c.h.b16 %v87
    %v457 = vunpack.c.l.b16 %v88
    %v458 = vunpack.c.h.b16 %v88
    %v459 = vunpack.c.l.b16 %v89
    %v460 = vunpack.c.h.b16 %v89
    %v461 = vunpack.c.l.b16 %v90
    %v462 = vunpack.c.h.b16 %v90
    %v463 = vunpack.c.l.b16 %v91
    %v464 = vunpack.c.h.b16 %v91
    %v465 = vunpack.c.l.b16 %v92
    %v466 = vunpack.c.h.b16 %v92
    %v467 = vunpack.c.l.b16 %v93
    %v468 = vunpack.c.h.b16 %v93
    %v469 = vunpack.c.l.b16 %v94
    %v470 = vunpack.c.h.b16 %v94
    %v471 = vunpack.c.l.b16 %v95
    %v472 = vunpack.c.h.b16 %v95
    %v473 = vunpack.c.l.b16 %v96
    %v474 = vunpack.c.h.b16 %v96
    %v475 = vunpack.c.l.b16 %v97
    %v476 = vunpack.c.h.b16 %v97
    %v477 = vunpack.c.l.b16 %v98
    %v478 = vunpack.c.h.b16 %v98
    %v479 = vunpack.c.l.b16 %v99
    %v480 = vunpack.c.h.b16 %v99
    %v481 = vunpack.c.l.b16 %v100
    %v482 = vunpack.c.h.b16 %v100
    %v483 = vunpack.c.l.b16 %v101
    %v484 = vunpack.c.h.b16 %v101
    %v485 = vunpack.c.l.b16 %v102
    %v486 = vunpack.c.h.b16 %v102
    %v487 = vunpack.c.l.b16 %v103
    %v488 = vunpack.c.h.b16 %v103
    %v489 = vunpack.c.l.b16 %v104
    %v490 = vunpack.c.h.b16 %v104
    %v491 = vunpack.c.l.b16 %v105
    %v492 = vunpack.c.h.b16 %v105
    %v493 = vunpack.c.l.b16 %v106
    %v494 = vunpack.c.h.b16 %v106
    %v495 = vunpack.c.l.b16 %v107
    %v496 = vunpack.c.h.b16 %v107
    %v497 = vunpack.c.l.b16 %v108
    %v498 = vunpack.c.h.b16 %v108
    %v499 = vunpack.c.l.b16 %v109
    %v500 = vunpack.c.h.b16 %v109
    %v501 = vunpack.c.l.b16 %v110
    %v502 = vunpack.c.h.b16 %v110
    %v503 = vunpack.c.l.b16 %v111
    %v504 = vunpack.c.h.b16 %v111
    %v505 = vunpack.c.l.b16 %v112
    %v506 = vunpack.c.h.b16 %v112
    %v507 = vunpack.c.l.b16 %v113
    %v508 = vunpack.c.h.b16 %v113
    %v509 = vunpack.c.l.b16 %v114
    %v510 = vunpack.c.h.b16 %v114
    %v511 = vunpack.c.l.b16 %v115
    %v512 = vunpack.c.h.b16 %v115
    %v513 = vunpack.c.l.b16 %v116
    %v514 = vunpack.c.h.b16 %v116
    %v515 = vunpack.c.l.b16 %v117
    %v516 = vunpack.c.h.b16 %v117
    %v517 = vunpack.c.l.b16 %v118
    %v518 = vunpack.c.h.b16 %v118
    %v519 = vunpack.c.l.b16 %v119
    %v520 = vunpack.c.h.b16 %v119
    %v521 = vunpack.c.l.b16 %v120
    %v522 = vunpack.c.h.b16 %v120
    %v523 = vunpack.c.l.b16 %v121
    %v524 = vunpack.c.h.b16 %v121
    %v525 = vunpack.c.l.b16 %v122
    %v526 = vunpack.c.h.b16 %v122
    %v527 = vunpack.c.l.b16 %v123
    %v528 = vunpack.c.h.b16 %v123
    %v529 = vunpack.c.l.b16 %v124
    %v530 = vunpack.c.h.b16 %v124
    %v531 = vunpack.c.l.b16 %v125
    %v532 = vunpack.c.h.b16 %v125
    %v533 = vunpack.c.l.b16 %v126
    %v534 = vunpack.c.h.b16 %v126
    %v535 = vunpack.c.l.b16 %v127
    %v536 = vunpack.c.h.b16 %v127
    %v537 = vunpack.c.l.b16 %v128
    %v538 = vunpack.c.h.b16 %v128
    %v539 = vunpack.c.l.b16 %v129
    %v540 = vunpack.c.h.b16 %v129
    %v541 = vunpack.c.l.b16 %v130
    %v542 = vunpack.c.h.b16 %v130
    %v543 = vunpack.c.l.b16 %v131
    %v544 = vunpack.c.h.b16 %v131
    %v545 = vunpack.c.l.b16 %v132
    %v546 = vunpack.c.h.b16 %v132
    %v547 = vunpack.c.l.b16 %v133
    %v548 = vunpack.c.h.b16 %v133
    %v549 = vunpack.c.l.b16 %v134
    %v550 = vunpack.c.h.b16 %v134
    %v551 = vunpack.c.l.b16 %v135
    %v552 = vunpack.c.h.b16 %v135
    %v553 = vunpack.c.l.b16 %v136
    %v554 = vunpack.c.h.b16 %v136
    %v555 = vunpack.c.l.b16 %v137
    %v556 = vunpack.c.h.b16 %v137
    %v557 = vunpack.c.l.b16 %v138
    %v558 = vunpack.c.h.b16 %v138
    %v559 = vunpack.c.l.b16 %v139
    %v560 = vunpack.c.h.b16 %v139
    %v561 = vunpack.c.l.b16 %v140
    %v562 = vunpack.c.h.b16 %v140
    %v563 = vunpack.c.l.b16 %v141
    %v564 = vunpack.c.h.b16 %v141
    %v565 = vunpack.c.l.b16 %v142
    %v566 = vunpack.c.h.b16 %v142
    %v567 = vunpack.c.l.b16 %v143
    %v568 = vunpack.c.h.b16 %v143
    %v569 = vunpack.c.l.b16 %v144
    %v570 = vunpack.c.h.b16 %v144
    %v571 = vunpack.c.l.b16 %v145
    %v572 = vunpack.c.h.b16 %v145
    %v573 = vunpack.c.l.b16 %v146
    %v574 = vunpack.c.h.b16 %v146
    %v575 = vunpack.c.l.b16 %v147
    %v576 = vunpack.c.h.b16 %v147
    %v577 = vunpack.c.l.b16 %v148
    %v578 = vunpack.c.h.b16 %v148
    %v579 = vunpack.c.l.b16 %v149
    %v580 = vunpack.c.h.b16 %v149
    %v581 = vunpack.c.l.b16 %v150
    %v582 = vunpack.c.h.b16 %v150
    %v583 = vunpack.c.l.b16 %v151
    %v584 = vunpack.c.h.b16 %v151
    %v585 = vunpack.c.l.b16 %v152
    %v586 = vunpack.c.h.b16 %v152
    %v587 = vunpack.c.l.b16 %v153
    %v588 = vunpack.c.h.b16 %v153
    %v589 = vunpack.c.l.b16 %v154
    %v590 = vunpack.c.h.b16 %v154
    %v591 = vunpack.c.l.b16 %v155
    %v592 = vunpack.c.h.b16 %v155
    %v593 = vunpack.c.l.b16 %v156
    %v594 = vunpack.c.h.b16 %v156
    %v595 = vunpack.c.l.b16 %v157
    %v596 = vunpack.c.h.b16 %v157
    %v597 = vunpack.c.l.b16 %v158
    %v598 = vunpack.c.h.b16 %v158
    %v599 = vunpack.c.l.b16 %v159
    %v600 = vunpack.c.h.b16 %v159
    %v601 = vunpack.c.l.b16 %v160
    %v602 = vunpack.c.h.b16 %v160
    %v603 = vunpack.c.l.b16 %v161
    %v604 = vunpack.c.h.b16 %v161
    %v605 = vunpack.c.l.b16 %v162
    %v606 = vunpack.c.h.b16 %v162
    %v607 = vunpack.c.l.b16 %v163
    %v608 = vunpack.c.h.b16 %v163
    %v609 = vunpack.c.l.b16 %v164
    %v610 = vunpack.c.h.b16 %v164
    %v611 = vunpack.c.l.b16 %v165
    %v612 = vunpack.c.h.b16 %v165
    %v613 = vunpack.c.l.b16 %v166
    %v614 = vunpack.c.h.b16 %v166
    %v615 = vunpack.c.l.b16 %v167
    %v616 = vunpack.c.h.b16 %v167
    %v617 = vunpack.c.l.b16 %v168
    %v618 = vunpack.c.h.b16 %v168
    %v619 = vunpack.c.l.b16 %v169
    %v620 = vunpack.c.h.b16 %v169
    %v621 = vunpack.c.l.b16 %v170
    %v622 = vunpack.c.h.b16 %v170
    %v623 = vunpack.c.l.b16 %v171
    %v624 = vunpack.c.h.b16 %v171
    %v625 = vunpack.c.l.b16 %v172
    %v626 = vunpack.c.h.b16 %v172
    %v627 = vunpack.c.l.b16 %v173
    %v628 = vunpack.c.h.b16 %v173
    %v629 = vunpack.c.l.b16 %v174
    %v630 = vunpack.c.h.b16 %v174
    %v631 = vunpack.c.l.b16 %v175
    %v632 = vunpack.c.h.b16 %v175
    %v633 = vunpack.c.l.b16 %v176
    %v634 = vunpack.c.h.b16 %v176
    %v635 = vunpack.c.l.b16 %v177
    %v636 = vunpack.c.h.b16 %v177
    %v637 = vunpack.c.l.b16 %v178
    %v638 = vunpack.c.h.b16 %v178
    %v639 = vunpack.c.l.b16 %v179
    %v640 = vunpack.c.h.b16 %v179
    %v641 = vunpack.c.l.b16 %v180
    %v642 = vunpack.c.h.b16 %v180
    %v643 = vunpack.c.l.b16 %v181
    %v644 = vunpack.c.h.b16 %v181
    %v645 = vunpack.c.l.b16 %v182
    %v646 = vunpack.c.h.b16 %v182
    %v647 = vunpack.c.l.b16 %v183
    %v648 = vunpack.c.h.b16 %v183
    %v649 = vunpack.c.l.b16 %v184
    %v650 = vunpack.c.h.b16 %v184
    %v651 = vunpack.c.l.b16 %v185
    %v652 = vunpack.c.h.b16 %v185
    %v653 = vunpack.c.l.b16 %v186
    %v654 = vunpack.c.h.b16 %v186
    %v655 = vunpack.c.l.b16 %v187
    %v656 = vunpack.c.h.b16 %v187
    %v657 = vunpack.c.l.b16 %v188
    %v658 = vunpack.c.h.b16 %v188
    %v659 = vunpack.c.l.b16 %v189
    %v660 = vunpack.c.h.b16 %v189
    %v661 = vunpack.c.l.b16 %v190
    %v662 = vunpack.c.h.b16 %v190
    %v663 = vunpack.c.l.b16 %v191
    %v664 = vunpack.c.h.b16 %v191
    %v665 = vunpack.c.l.b16 %v192
    %v666 = vunpack.c.h.b16 %v192
    %v667 = vpack.c.b16 %v415, %v411
    %v668 = vpack.c.b16 %v416, %v412
    %v669 = vpack.c.b16 %v417, %v413
    %v670 = vpack.c.b16 %v418, %v414
    %v671 = vpack.c.b16 %v423, %v419
    %v672 = vpack.c.b16 %v424, %v420
    %v673 = vpack.c.b16 %v425, %v421
    %v674 = vpack.c.b16 %v426, %v422
    %v675 = vpack.c.b16 %v431, %v427
    %v676 = vpack.c.b16 %v432, %v428
    %v677 = vpack.c.b16 %v433, %v429
    %v678 = vpack.c.b16 %v434, %v430
    %v679 = vpack.c.b16 %v439, %v435
    %v680 = vpack.c.b16 %v440, %v436
    %v681 = vpack.c.b16 %v441, %v437
    %v682 = vpack.c.b16 %v442, %v438
    %v683 = vpack.c.b16 %v447, %v443
    %v684 = vpack.c.b16 %v448, %v444
    %v685 = vpack.c.b16 %v449, %v445
    %v686 = vpack.c.b16 %v450, %v446
    %v687 = vpack.c.b16 %v455, %v451
    %v688 = vpack.c.b16 %v456, %v452
    %v689 = vpack.c.b16 %v457, %v453
    %v690 = vpack.c.b16 %v458, %v454
    %v691 = vpack.c.b16 %v463, %v459
    %v692 = vpack.c.b16 %v464, %v460
    %v693 = vpack.c.b16 %v465, %v461
    %v694 = vpack.c.b16 %v466, %v462
    %v695 = vpack.c.b16 %v471, %v467
    %v696 = vpack.c.b16 %v472, %v468
    %v697 = vpack.c.b16 %v473, %v469
    %v698 = vpack.c.b16 %v474, %v470
    %v699 = vpack.c.b16 %v479, %v475
    %v700 = vpack.c.b16 %v480, %v476
    %v701 = vpack.c.b16 %v481, %v477
    %v702 = vpack.c.b16 %v482, %v478
    %v703 = vpack.c.b16 %v487, %v483
    %v704 = vpack.c.b16 %v488, %v484
    %v705 = vpack.c.b16 %v489, %v485
    %v706 = vpack.c.b16 %v490, %v486
    %v707 = vpack.c.b16 %v495, %v491
    %v708 = vpack.c.b16 %v496, %v492
    %v709 = vpack.c.b16 %v497, %v493
    %v710 = vpack.c.b16 %v498, %v494
    %v711 = vpack.c.b16 %v503, %v499
    %v712 = vpack.c.b16 %v504, %v500
    %v713 = vpack.c.b16 %v505, %v501
    %v714 = vpack.c.b16 %v506, %v502
    %v715 = vpack.c.b16 %v511, %v507
    %v716 = vpack.c.b16 %v512, %v508
    %v717 = vpack.c.b16 %v513, %v509
    %v718 = vpack.c.b16 %v514, %v510
    %v719 = vpack.c.b16 %v519, %v515
    %v720 = vpack.c.b16 %v520, %v516
    %v721 = vpack.c.b16 %v521, %v517
    %v722 = vpack.c.b16 %v522, %v518
    %v723 = vpack.c.b16 %v527, %v523
    %v724 = vpack.c.b16 %v528, %v524
    %v725 = vpack.c.b16 %v529, %v525
    %v726 = vpack.c.b16 %v530, %v526
    %v727 = vpack.c.b16 %v535, %v531
    %v728 = vpack.c.b16 %v536, %v532
    %v729 = vpack.c.b16 %v537, %v533
    %v730 = vpack.c.b16 %v538, %v534
    %v731 = vpack.c.b16 %v543, %v539
    %v732 = vpack.c.b16 %v544, %v540
    %v733 = vpack.c.b16 %v545, %v541
    %v734 = vpack.c.b16 %v546, %v542
    %v735 = vpack.c.b16 %v551, %v547
    %v736 = vpack.c.b16 %v552, %v548
    %v737 = vpack.c.b16 %v553, %v549
    %v738 = vpack.c.b16 %v554, %v550
    %v739 = vpack.c.b16 %v559, %v555
    %v740 = vpack.c.b16 %v560, %v556
    %v741 = vpack.c.b16 %v561, %v557
    %v742 = vpack.c.b16 %v562, %v558
    %v743 = vpack.c.b16 %v567, %v563
    %v744 = vpack.c.b16 %v568, %v564
    %v745 = vpack.c.b16 %v569, %v565
    %v746 = vpack.c.b16 %v570, %v566
    %v747 = vpack.c.b16 %v575, %v571
    %v748 = vpack.c.b16 %v576, %v572
    %v749 = vpack.c.b16 %v577, %v573
    %v750 = vpack.c.b16 %v578, %v574
    %v751 = vpack.c.b16 %v583, %v579
    %v752 = vpack.c.b16 %v584, %v580
    %v753 = vpack.c.b16 %v585, %v581
    %v754 = vpack.c.b16 %v586, %v582
    %v755 = vpack.c.b16 %v591, %v587
    %v756 = vpack.c.b16 %v592, %v588
    %v757 = vpack.c.b16 %v593, %v589
    %v758 = vpack.c.b16 %v594, %v590
    %v759 = vpack.c.b16 %v599, %v595
    %v760 = vpack.c.b16 %v600, %v596
    %v761 = vpack.c.b16 %v601, %v597
    %v762 = vpack.c.b16 %v602, %v598
    %v763 = vpack.c.b16 %v607, %v603
    %v764 = vpack.c.b16 %v608, %v604
    %v765 = vpack.c.b16 %v609, %v605
    %v766 = vpack.c.b16 %v610, %v606
    %v767 = vpack.c.b16 %v615, %v611
    %v768 = vpack.c.b16 %v616, %v612
    %v769 = vpack.c.b16 %v617, %v613
    %v770 = vpack.c.b16 %v618, %v614
    %v771 = vpack.c.b16 %v623, %v619
    %v772 = vpack.c.b16 %v624, %v620
    %v773 = vpack.c.b16 %v625, %v621
    %v774 = vpack.c.b16 %v626, %v622
    %v775 = vpack.c.b16 %v631, %v627
    %v776 = vpack.c.b16 %v632, %v628
    %v777 = vpack.c.b16 %v633, %v629
    %v778 = vpack.c.b16 %v634, %v630
    %v779 = vpack.c.b16 %v639, %v635
    %v780 = vpack.c.b16 %v640, %v636
    %v781 = vpack.c.b16 %v641, %v637
    %v782 = vpack.c.b16 %v642, %v638
    %v783 = vpack.c.b16 %v647, %v643
    %v784 = vpack.c.b16 %v648, %v644
    %v785 = vpack.c.b16 %v649, %v645
    %v786 = vpack.c.b16 %v650, %v646
    %v787 = vpack.c.b16 %v655, %v651
    %v788 = vpack.c.b16 %v656, %v652
    %v789 = vpack.c.b16 %v657, %v653
    %v790 = vpack.c.b16 %v658, %v654
    %v791 = vpack.c.b16 %v663, %v659
    %v792 = vpack.c.b16 %v664, %v660
    %v793 = vpack.c.b16 %v665, %v661
    %v794 = vpack.c.b16 %v666, %v662
    %923 = vmatprep.subr.bf16.mxu0 %v668
    %924 = vmatpush1.bf16.msra.mxu0 %v667
    %925 = vmatprep.subr.bf16.mxu0 %v672
    %926 = vmatpush1.bf16.msra.mxu0 %v671
    %927 = vmatprep.subr.bf16.mxu0 %v676
    %928 = vmatpush1.bf16.msra.mxu0 %v675
    %929 = vmatprep.subr.bf16.mxu0 %v680
    %930 = vmatpush1.bf16.msra.mxu0 %v679
    %931 = vmatprep.subr.bf16.mxu0 %v684
    %932 = vmatpush1.bf16.msra.mxu0 %v683
    %933 = vmatprep.subr.bf16.mxu0 %v688
    %934 = vmatpush1.bf16.msra.mxu0 %v687
    %935 = vmatprep.subr.bf16.mxu0 %v692
    %936 = vmatpush1.bf16.msra.mxu0 %v691
    %937 = vmatprep.subr.bf16.mxu0 %v696
    %938 = vmatpush1.bf16.msra.mxu0 %v695
    %939 = vmatprep.subr.bf16.mxu0 %v700
    %940 = vmatpush1.bf16.msra.mxu0 %v699
    %941 = vmatprep.subr.bf16.mxu0 %v704
    %942 = vmatpush1.bf16.msra.mxu0 %v703
    %943 = vmatprep.subr.bf16.mxu0 %v708
    %944 = vmatpush1.bf16.msra.mxu0 %v707
    %945 = vmatprep.subr.bf16.mxu0 %v712
    %946 = vmatpush1.bf16.msra.mxu0 %v711
    %947 = vmatprep.subr.bf16.mxu0 %v716
    %948 = vmatpush1.bf16.msra.mxu0 %v715
    %949 = vmatprep.subr.bf16.mxu0 %v720
    %950 = vmatpush1.bf16.msra.mxu0 %v719
    %951 = vmatprep.subr.bf16.mxu0 %v724
    %952 = vmatpush1.bf16.msra.mxu0 %v723
    %953 = vmatprep.subr.bf16.mxu0 %v728
    %954 = vmatpush1.bf16.msra.mxu0 %v727
    %955 = vmatprep.mubr.bf16.mxu0 %v259
    %956 = vmatmul.mubr.bf16.gmra.mrb[0].mxu0 %v258
    %v957 = vpop.f32.mrb[0].mxu0
    %v958 = vadd.f32 %v266, %v957
    %v959 = vpop.f32.mrb[0].mxu0
    %v960 = vadd.f32 %v270, %v959
    %v961 = vpop.f32.mrb[0].mxu0
    %v962 = vpop.f32.mrb[0].mxu0
    %963 = vdwg.mxu0
    %964 = vmatprep.subr.bf16.mxu0 %v732
    %965 = vmatpush1.bf16.msra.mxu0 %v731
    %966 = vmatprep.subr.bf16.mxu0 %v736
    %967 = vmatpush1.bf16.msra.mxu0 %v735
    %968 = vmatprep.subr.bf16.mxu0 %v740
    %969 = vmatpush1.bf16.msra.mxu0 %v739
    %970 = vmatprep.subr.bf16.mxu0 %v744
    %971 = vmatpush1.bf16.msra.mxu0 %v743
    %972 = vmatprep.subr.bf16.mxu0 %v748
    %973 = vmatpush1.bf16.msra.mxu0 %v747
    %974 = vmatprep.subr.bf16.mxu0 %v752
    %975 = vmatpush1.bf16.msra.mxu0 %v751
    %976 = vmatprep.subr.bf16.mxu0 %v756
    %977 = vmatpush1.bf16.msra.mxu0 %v755
    %978 = vmatprep.subr.bf16.mxu0 %v760
    %979 = vmatpush1.bf16.msra.mxu0 %v759
    %980 = vmatprep.subr.bf16.mxu0 %v764
    %981 = vmatpush1.bf16.msra.mxu0 %v763
    %982 = vmatprep.subr.bf16.mxu0 %v768
    %983 = vmatpush1.bf16.msra.mxu0 %v767
    %984 = vmatprep.subr.bf16.mxu0 %v772
    %985 = vmatpush1.bf16.msra.mxu0 %v771
    %986 = vmatprep.subr.bf16.mxu0 %v776
    %987 = vmatpush1.bf16.msra.mxu0 %v775
    %988 = vmatprep.subr.bf16.mxu0 %v780
    %989 = vmatpush1.bf16.msra.mxu0 %v779
    %990 = vmatprep.subr.bf16.mxu0 %v784
    %991 = vmatpush1.bf16.msra.mxu0 %v783
    %992 = vmatprep.subr.bf16.mxu0 %v788
    %993 = vmatpush1.bf16.msra.mxu0 %v787
    %994 = vmatprep.subr.bf16.mxu0 %v792
    %995 = vmatpush1.bf16.msra.mxu0 %v791
    %996 = vmatprep.mubr.bf16.mxu0 %v261
    %997 = vmatmul.mubr.bf16.gmra.mrb[0].mxu0 %v260
    %v998 = vpop.f32.mrb[0].mxu0
    %v999 = vadd.f32 %v958, %v998
    %v1000 = vpop.f32.mrb[0].mxu0
    %v1001 = vadd.f32 %v960, %v1000
    %v1002 = vpop.f32.mrb[0].mxu0
    %v1003 = vpop.f32.mrb[0].mxu0
    %1004 = vdwg.mxu0
    %1005 = vmatprep.subr.bf16.mxu0 %v670
    %1006 = vmatpush1.bf16.msra.mxu0 %v669
    %1007 = vmatprep.subr.bf16.mxu0 %v674
    %1008 = vmatpush1.bf16.msra.mxu0 %v673
    %1009 = vmatprep.subr.bf16.mxu0 %v678
    %1010 = vmatpush1.bf16.msra.mxu0 %v677
    %1011 = vmatprep.subr.bf16.mxu0 %v682
    %1012 = vmatpush1.bf16.msra.mxu0 %v681
    %1013 = vmatprep.subr.bf16.mxu0 %v686
    %1014 = vmatpush1.bf16.msra.mxu0 %v685
    %1015 = vmatprep.subr.bf16.mxu0 %v690
    %1016 = vmatpush1.bf16.msra.mxu0 %v689
    %1017 = vmatprep.subr.bf16.mxu0 %v694
    %1018 = vmatpush1.bf16.msra.mxu0 %v693
    %1019 = vmatprep.subr.bf16.mxu0 %v698
    %1020 = vmatpush1.bf16.msra.mxu0 %v697
    %1021 = vmatprep.subr.bf16.mxu0 %v702
    %1022 = vmatpush1.bf16.msra.mxu0 %v701
    %1023 = vmatprep.subr.bf16.mxu0 %v706
    %1024 = vmatpush1.bf16.msra.mxu0 %v705
    %1025 = vmatprep.subr.bf16.mxu0 %v710
    %1026 = vmatpush1.bf16.msra.mxu0 %v709
    %1027 = vmatprep.subr.bf16.mxu0 %v714
    %1028 = vmatpush1.bf16.msra.mxu0 %v713
    %1029 = vmatprep.subr.bf16.mxu0 %v718
    %1030 = vmatpush1.bf16.msra.mxu0 %v717
    %1031 = vmatprep.subr.bf16.mxu0 %v722
    %1032 = vmatpush1.bf16.msra.mxu0 %v721
    %1033 = vmatprep.subr.bf16.mxu0 %v726
    %1034 = vmatpush1.bf16.msra.mxu0 %v725
    %1035 = vmatprep.subr.bf16.mxu0 %v730
    %1036 = vmatpush1.bf16.msra.mxu0 %v729
    %1037 = vmatprep.mubr.bf16.mxu0 %v259
    %1038 = vmatmul.mubr.bf16.gmra.mrb[0].mxu0 %v258
    %v1039 = vpop.f32.mrb[0].mxu0
    %v1040 = vadd.f32 %v274, %v1039
    %v1041 = vpop.f32.mrb[0].mxu0
    %v1042 = vadd.f32 %v278, %v1041
    %v1043 = vpop.f32.mrb[0].mxu0
    %v1044 = vpop.f32.mrb[0].mxu0
    %1045 = vdwg.mxu0
    %1046 = vmatprep.subr.bf16.mxu0 %v734
    %1047 = vmatpush1.bf16.msra.mxu0 %v733
    %1048 = vmatprep.subr.bf16.mxu0 %v738
    %1049 = vmatpush1.bf16.msra.mxu0 %v737
    %1050 = vmatprep.subr.bf16.mxu0 %v742
    %1051 = vmatpush1.bf16.msra.mxu0 %v741
    %1052 = vmatprep.subr.bf16.mxu0 %v746
    %1053 = vmatpush1.bf16.msra.mxu0 %v745
    %1054 = vmatprep.subr.bf16.mxu0 %v750
    %1055 = vmatpush1.bf16.msra.mxu0 %v749
    %1056 = vmatprep.subr.bf16.mxu0 %v754
    %1057 = vmatpush1.bf16.msra.mxu0 %v753
    %1058 = vmatprep.subr.bf16.mxu0 %v758
    %1059 = vmatpush1.bf16.msra.mxu0 %v757
    %1060 = vmatprep.subr.bf16.mxu0 %v762
    %1061 = vmatpush1.bf16.msra.mxu0 %v761
    %1062 = vmatprep.subr.bf16.mxu0 %v766
    %1063 = vmatpush1.bf16.msra.mxu0 %v765
    %1064 = vmatprep.subr.bf16.mxu0 %v770
    %1065 = vmatpush1.bf16.msra.mxu0 %v769
    %1066 = vmatprep.subr.bf16.mxu0 %v774
    %1067 = vmatpush1.bf16.msra.mxu0 %v773
    %1068 = vmatprep.subr.bf16.mxu0 %v778
    %1069 = vmatpush1.bf16.msra.mxu0 %v777
    %1070 = vmatprep.subr.bf16.mxu0 %v782
    %1071 = vmatpush1.bf16.msra.mxu0 %v781
    %1072 = vmatprep.subr.bf16.mxu0 %v786
    %1073 = vmatpush1.bf16.msra.mxu0 %v785
    %1074 = vmatprep.subr.bf16.mxu0 %v790
    %1075 = vmatpush1.bf16.msra.mxu0 %v789
    %1076 = vmatprep.subr.bf16.mxu0 %v794
    %1077 = vmatpush1.bf16.msra.mxu0 %v793
    %1078 = vmatprep.mubr.bf16.mxu0 %v261
    %1079 = vmatmul.mubr.bf16.gmra.mrb[0].mxu0 %v260
    %v1080 = vpop.f32.mrb[0].mxu0
    %v1081 = vadd.f32 %v1040, %v1080
    %v1082 = vpop.f32.mrb[0].mxu0
    %v1083 = vadd.f32 %v1042, %v1082
    %v1084 = vpop.f32.mrb[0].mxu0
    %v1085 = vpop.f32.mrb[0].mxu0
    %1086 = vdwg.mxu0
    %v1087 = vmul.f32 %v194, %v194
    %v1088 = vmul.f32 %v195, %v195
    %v1089 = vmul.f32 %v196, %v196
    %v1090 = vmul.f32 %v197, %v197
    %v1091 = vmul.f32 %v198, %v198
    %v1092 = vmul.f32 %v199, %v199
    %v1093 = vmul.f32 %v200, %v200
    %v1094 = vmul.f32 %v201, %v201
    %v1095 = vmul.f32 %v202, %v202
    %v1096 = vmul.f32 %v203, %v203
    %v1097 = vmul.f32 %v204, %v204
    %v1098 = vmul.f32 %v205, %v205
    %v1099 = vmul.f32 %v206, %v206
    %v1100 = vmul.f32 %v207, %v207
    %v1101 = vmul.f32 %v208, %v208
    %v1102 = vmul.f32 %v209, %v209
    %v1103 = vmul.f32 %v210, %v210
    %v1104 = vmul.f32 %v211, %v211
    %v1105 = vmul.f32 %v212, %v212
    %v1106 = vmul.f32 %v213, %v213
    %v1107 = vmul.f32 %v214, %v214
    %v1108 = vmul.f32 %v215, %v215
    %v1109 = vmul.f32 %v216, %v216
    %v1110 = vmul.f32 %v217, %v217
    %v1111 = vmul.f32 %v218, %v218
    %v1112 = vmul.f32 %v219, %v219
    %v1113 = vmul.f32 %v220, %v220
    %v1114 = vmul.f32 %v221, %v221
    %v1115 = vmul.f32 %v222, %v222
    %v1116 = vmul.f32 %v223, %v223
    %v1117 = vmul.f32 %v224, %v224
    %v1118 = vmul.f32 %v225, %v225
    %v1119 = vmul.f32 %v226, %v226
    %v1120 = vmul.f32 %v227, %v227
    %v1121 = vmul.f32 %v228, %v228
    %v1122 = vmul.f32 %v229, %v229
    %v1123 = vmul.f32 %v230, %v230
    %v1124 = vmul.f32 %v231, %v231
    %v1125 = vmul.f32 %v232, %v232
    %v1126 = vmul.f32 %v233, %v233
    %v1127 = vmul.f32 %v234, %v234
    %v1128 = vmul.f32 %v235, %v235
    %v1129 = vmul.f32 %v236, %v236
    %v1130 = vmul.f32 %v237, %v237
    %v1131 = vmul.f32 %v238, %v238
    %v1132 = vmul.f32 %v239, %v239
    %v1133 = vmul.f32 %v240, %v240
    %v1134 = vmul.f32 %v241, %v241
    %v1135 = vmul.f32 %v242, %v242
    %v1136 = vmul.f32 %v243, %v243
    %v1137 = vmul.f32 %v244, %v244
    %v1138 = vmul.f32 %v245, %v245
    %v1139 = vmul.f32 %v246, %v246
    %v1140 = vmul.f32 %v247, %v247
    %v1141 = vmul.f32 %v248, %v248
    %v1142 = vmul.f32 %v249, %v249
    %v1143 = vmul.f32 %v250, %v250
    %v1144 = vmul.f32 %v251, %v251
    %v1145 = vmul.f32 %v252, %v252
    %v1146 = vmul.f32 %v253, %v253
    %v1147 = vmul.f32 %v254, %v254
    %v1148 = vmul.f32 %v255, %v255
    %v1149 = vmul.f32 %v256, %v256
    %v1150 = vmul.f32 %v257, %v257
    %v1151 = vadd.f32 %v1087, %v1088
    %v1152 = vadd.f32 %v1151, %v1089
    %v1153 = vadd.f32 %v1152, %v1090
    %1154 = vadd.xlane.f32.xlu0 %v1153
    %v1155 = vpop.xlane.xlu0 %1154
    %v1156 = vadd.f32 %v1091, %v1092
    %v1157 = vadd.f32 %v1156, %v1093
    %v1158 = vadd.f32 %v1157, %v1094
    %1159 = vadd.xlane.f32.xlu0 %v1158
    %v1160 = vpop.xlane.xlu0 %1159
    %v1161 = vadd.f32 %v1095, %v1096
    %v1162 = vadd.f32 %v1161, %v1097
    %v1163 = vadd.f32 %v1162, %v1098
    %1164 = vadd.xlane.f32.xlu0 %v1163
    %v1165 = vpop.xlane.xlu0 %1164
    %v1166 = vadd.f32 %v1099, %v1100
    %v1167 = vadd.f32 %v1166, %v1101
    %v1168 = vadd.f32 %v1167, %v1102
    %1169 = vadd.xlane.f32.xlu0 %v1168
    %v1170 = vpop.xlane.xlu0 %1169
    %v1171 = vadd.f32 %v1103, %v1104
    %v1172 = vadd.f32 %v1171, %v1105
    %v1173 = vadd.f32 %v1172, %v1106
    %1174 = vadd.xlane.f32.xlu0 %v1173
    %v1175 = vpop.xlane.xlu0 %1174
    %v1176 = vadd.f32 %v1107, %v1108
    %v1177 = vadd.f32 %v1176, %v1109
    %v1178 = vadd.f32 %v1177, %v1110
    %1179 = vadd.xlane.f32.xlu0 %v1178
    %v1180 = vpop.xlane.xlu0 %1179
    %v1181 = vadd.f32 %v1111, %v1112
    %v1182 = vadd.f32 %v1181, %v1113
    %v1183 = vadd.f32 %v1182, %v1114
    %1184 = vadd.xlane.f32.xlu0 %v1183
    %v1185 = vpop.xlane.xlu0 %1184
    %v1186 = vadd.f32 %v1115, %v1116
    %v1187 = vadd.f32 %v1186, %v1117
    %v1188 = vadd.f32 %v1187, %v1118
    %1189 = vadd.xlane.f32.xlu0 %v1188
    %v1190 = vpop.xlane.xlu0 %1189
    %v1191 = vadd.f32 %v1119, %v1120
    %v1192 = vadd.f32 %v1191, %v1121
    %v1193 = vadd.f32 %v1192, %v1122
    %1194 = vadd.xlane.f32.xlu0 %v1193
    %v1195 = vpop.xlane.xlu0 %1194
    %v1196 = vadd.f32 %v1123, %v1124
    %v1197 = vadd.f32 %v1196, %v1125
    %v1198 = vadd.f32 %v1197, %v1126
    %1199 = vadd.xlane.f32.xlu0 %v1198
    %v1200 = vpop.xlane.xlu0 %1199
    %v1201 = vadd.f32 %v1127, %v1128
    %v1202 = vadd.f32 %v1201, %v1129
    %v1203 = vadd.f32 %v1202, %v1130
    %1204 = vadd.xlane.f32.xlu0 %v1203
    %v1205 = vpop.xlane.xlu0 %1204
    %v1206 = vadd.f32 %v1131, %v1132
    %v1207 = vadd.f32 %v1206, %v1133
    %v1208 = vadd.f32 %v1207, %v1134
    %1209 = vadd.xlane.f32.xlu0 %v1208
    %v1210 = vpop.xlane.xlu0 %1209
    %v1211 = vadd.f32 %v1135, %v1136
    %v1212 = vadd.f32 %v1211, %v1137
    %v1213 = vadd.f32 %v1212, %v1138
    %1214 = vadd.xlane.f32.xlu0 %v1213
    %v1215 = vpop.xlane.xlu0 %1214
    %v1216 = vadd.f32 %v1139, %v1140
    %v1217 = vadd.f32 %v1216, %v1141
    %v1218 = vadd.f32 %v1217, %v1142
    %1219 = vadd.xlane.f32.xlu0 %v1218
    %v1220 = vpop.xlane.xlu0 %1219
    %v1221 = vadd.f32 %v1143, %v1144
    %v1222 = vadd.f32 %v1221, %v1145
    %v1223 = vadd.f32 %v1222, %v1146
    %1224 = vadd.xlane.f32.xlu0 %v1223
    %v1225 = vpop.xlane.xlu0 %1224
    %v1226 = vadd.f32 %v1147, %v1148
    %v1227 = vadd.f32 %v1226, %v1149
    %v1228 = vadd.f32 %v1227, %v1150
    %1229 = vadd.xlane.f32.xlu0 %v1228
    %v1230 = vpop.xlane.xlu0 %1229
    %v1231 = vrsqrt.pop %v1155
    %v1232 = vmul.f32 %v1155, %v1231
    %vm1233 = vcmp.eq.f32.partialorder %v1155, inf
    %v1234 = vsel %vm1233, %v1155, %v1232
    %vm1235 = vcmp.eq.f32.partialorder %v1155, 0.0
    %v1236 = vand.u32 %v1155, 2147483648
    %v1237 = vsel %vm1235, %v1236, %v1234
    %v1238 = vrsqrt.pop %v1160
    %v1239 = vmul.f32 %v1160, %v1238
    %vm1240 = vcmp.eq.f32.partialorder %v1160, inf
    %v1241 = vsel %vm1240, %v1160, %v1239
    %vm1242 = vcmp.eq.f32.partialorder %v1160, 0.0
    %v1243 = vand.u32 %v1160, 2147483648
    %v1244 = vsel %vm1242, %v1243, %v1241
    %v1245 = vrsqrt.pop %v1165
    %v1246 = vmul.f32 %v1165, %v1245
    %vm1247 = vcmp.eq.f32.partialorder %v1165, inf
    %v1248 = vsel %vm1247, %v1165, %v1246
    %vm1249 = vcmp.eq.f32.partialorder %v1165, 0.0
    %v1250 = vand.u32 %v1165, 2147483648
    %v1251 = vsel %vm1249, %v1250, %v1248
    %v1252 = vrsqrt.pop %v1170
    %v1253 = vmul.f32 %v1170, %v1252
    %vm1254 = vcmp.eq.f32.partialorder %v1170, inf
    %v1255 = vsel %vm1254, %v1170, %v1253
    %vm1256 = vcmp.eq.f32.partialorder %v1170, 0.0
    %v1257 = vand.u32 %v1170, 2147483648
    %v1258 = vsel %vm1256, %v1257, %v1255
    %v1259 = vrsqrt.pop %v1175
    %v1260 = vmul.f32 %v1175, %v1259
    %vm1261 = vcmp.eq.f32.partialorder %v1175, inf
    %v1262 = vsel %vm1261, %v1175, %v1260
    %vm1263 = vcmp.eq.f32.partialorder %v1175, 0.0
    %v1264 = vand.u32 %v1175, 2147483648
    %v1265 = vsel %vm1263, %v1264, %v1262
    %v1266 = vrsqrt.pop %v1180
    %v1267 = vmul.f32 %v1180, %v1266
    %vm1268 = vcmp.eq.f32.partialorder %v1180, inf
    %v1269 = vsel %vm1268, %v1180, %v1267
    %vm1270 = vcmp.eq.f32.partialorder %v1180, 0.0
    %v1271 = vand.u32 %v1180, 2147483648
    %v1272 = vsel %vm1270, %v1271, %v1269
    %v1273 = vrsqrt.pop %v1185
    %v1274 = vmul.f32 %v1185, %v1273
    %vm1275 = vcmp.eq.f32.partialorder %v1185, inf
    %v1276 = vsel %vm1275, %v1185, %v1274
    %vm1277 = vcmp.eq.f32.partialorder %v1185, 0.0
    %v1278 = vand.u32 %v1185, 2147483648
    %v1279 = vsel %vm1277, %v1278, %v1276
    %v1280 = vrsqrt.pop %v1190
    %v1281 = vmul.f32 %v1190, %v1280
    %vm1282 = vcmp.eq.f32.partialorder %v1190, inf
    %v1283 = vsel %vm1282, %v1190, %v1281
    %vm1284 = vcmp.eq.f32.partialorder %v1190, 0.0
    %v1285 = vand.u32 %v1190, 2147483648
    %v1286 = vsel %vm1284, %v1285, %v1283
    %v1287 = vrsqrt.pop %v1195
    %v1288 = vmul.f32 %v1195, %v1287
    %vm1289 = vcmp.eq.f32.partialorder %v1195, inf
    %v1290 = vsel %vm1289, %v1195, %v1288
    %vm1291 = vcmp.eq.f32.partialorder %v1195, 0.0
    %v1292 = vand.u32 %v1195, 2147483648
    %v1293 = vsel %vm1291, %v1292, %v1290
    %v1294 = vrsqrt.pop %v1200
    %v1295 = vmul.f32 %v1200, %v1294
    %vm1296 = vcmp.eq.f32.partialorder %v1200, inf
    %v1297 = vsel %vm1296, %v1200, %v1295
    %vm1298 = vcmp.eq.f32.partialorder %v1200, 0.0
    %v1299 = vand.u32 %v1200, 2147483648
    %v1300 = vsel %vm1298, %v1299, %v1297
    %v1301 = vrsqrt.pop %v1205
    %v1302 = vmul.f32 %v1205, %v1301
    %vm1303 = vcmp.eq.f32.partialorder %v1205, inf
    %v1304 = vsel %vm1303, %v1205, %v1302
    %vm1305 = vcmp.eq.f32.partialorder %v1205, 0.0
    %v1306 = vand.u32 %v1205, 2147483648
    %v1307 = vsel %vm1305, %v1306, %v1304
    %v1308 = vrsqrt.pop %v1210
    %v1309 = vmul.f32 %v1210, %v1308
    %vm1310 = vcmp.eq.f32.partialorder %v1210, inf
    %v1311 = vsel %vm1310, %v1210, %v1309
    %vm1312 = vcmp.eq.f32.partialorder %v1210, 0.0
    %v1313 = vand.u32 %v1210, 2147483648
    %v1314 = vsel %vm1312, %v1313, %v1311
    %v1315 = vrsqrt.pop %v1215
    %v1316 = vmul.f32 %v1215, %v1315
    %vm1317 = vcmp.eq.f32.partialorder %v1215, inf
    %v1318 = vsel %vm1317, %v1215, %v1316
    %vm1319 = vcmp.eq.f32.partialorder %v1215, 0.0
    %v1320 = vand.u32 %v1215, 2147483648
    %v1321 = vsel %vm1319, %v1320, %v1318
    %v1322 = vrsqrt.pop %v1220
    %v1323 = vmul.f32 %v1220, %v1322
    %vm1324 = vcmp.eq.f32.partialorder %v1220, inf
    %v1325 = vsel %vm1324, %v1220, %v1323
    %vm1326 = vcmp.eq.f32.partialorder %v1220, 0.0
    %v1327 = vand.u32 %v1220, 2147483648
    %v1328 = vsel %vm1326, %v1327, %v1325
    %v1329 = vrsqrt.pop %v1225
    %v1330 = vmul.f32 %v1225, %v1329
    %vm1331 = vcmp.eq.f32.partialorder %v1225, inf
    %v1332 = vsel %vm1331, %v1225, %v1330
    %vm1333 = vcmp.eq.f32.partialorder %v1225, 0.0
    %v1334 = vand.u32 %v1225, 2147483648
    %v1335 = vsel %vm1333, %v1334, %v1332
    %v1336 = vrsqrt.pop %v1230
    %v1337 = vmul.f32 %v1230, %v1336
    %vm1338 = vcmp.eq.f32.partialorder %v1230, inf
    %v1339 = vsel %vm1338, %v1230, %v1337
    %vm1340 = vcmp.eq.f32.partialorder %v1230, 0.0
    %v1341 = vand.u32 %v1230, 2147483648
    %v1342 = vsel %vm1340, %v1341, %v1339
    %v1343 = vmax.f32 %v1237, 1e-12
    %v1344 = vmax.f32 %v1244, 1e-12
    %v1345 = vmax.f32 %v1251, 1e-12
    %v1346 = vmax.f32 %v1258, 1e-12
    %v1347 = vmax.f32 %v1265, 1e-12
    %v1348 = vmax.f32 %v1272, 1e-12
    %v1349 = vmax.f32 %v1279, 1e-12
    %v1350 = vmax.f32 %v1286, 1e-12
    %v1351 = vmax.f32 %v1293, 1e-12
    %v1352 = vmax.f32 %v1300, 1e-12
    %v1353 = vmax.f32 %v1307, 1e-12
    %v1354 = vmax.f32 %v1314, 1e-12
    %v1355 = vmax.f32 %v1321, 1e-12
    %v1356 = vmax.f32 %v1328, 1e-12
    %v1357 = vmax.f32 %v1335, 1e-12
    %v1358 = vmax.f32 %v1342, 1e-12
    %v1359 = vrcp.pop %v1343
    %v1360 = vmul.f32 %v194, %v1359
    %v1361 = vmul.f32 %v195, %v1359
    %v1362 = vmul.f32 %v196, %v1359
    %v1363 = vmul.f32 %v197, %v1359
    %v1364 = vrcp.pop %v1344
    %v1365 = vmul.f32 %v198, %v1364
    %v1366 = vmul.f32 %v199, %v1364
    %v1367 = vmul.f32 %v200, %v1364
    %v1368 = vmul.f32 %v201, %v1364
    %v1369 = vrcp.pop %v1345
    %v1370 = vmul.f32 %v202, %v1369
    %v1371 = vmul.f32 %v203, %v1369
    %v1372 = vmul.f32 %v204, %v1369
    %v1373 = vmul.f32 %v205, %v1369
    %v1374 = vrcp.pop %v1346
    %v1375 = vmul.f32 %v206, %v1374
    %v1376 = vmul.f32 %v207, %v1374
    %v1377 = vmul.f32 %v208, %v1374
    %v1378 = vmul.f32 %v209, %v1374
    %v1379 = vrcp.pop %v1347
    %v1380 = vmul.f32 %v210, %v1379
    %v1381 = vmul.f32 %v211, %v1379
    %v1382 = vmul.f32 %v212, %v1379
    %v1383 = vmul.f32 %v213, %v1379
    %v1384 = vrcp.pop %v1348
    %v1385 = vmul.f32 %v214, %v1384
    %v1386 = vmul.f32 %v215, %v1384
    %v1387 = vmul.f32 %v216, %v1384
    %v1388 = vmul.f32 %v217, %v1384
    %v1389 = vrcp.pop %v1349
    %v1390 = vmul.f32 %v218, %v1389
    %v1391 = vmul.f32 %v219, %v1389
    %v1392 = vmul.f32 %v220, %v1389
    %v1393 = vmul.f32 %v221, %v1389
    %v1394 = vrcp.pop %v1350
    %v1395 = vmul.f32 %v222, %v1394
    %v1396 = vmul.f32 %v223, %v1394
    %v1397 = vmul.f32 %v224, %v1394
    %v1398 = vmul.f32 %v225, %v1394
    %v1399 = vrcp.pop %v1351
    %v1400 = vmul.f32 %v226, %v1399
    %v1401 = vmul.f32 %v227, %v1399
    %v1402 = vmul.f32 %v228, %v1399
    %v1403 = vmul.f32 %v229, %v1399
    %v1404 = vrcp.pop %v1352
    %v1405 = vmul.f32 %v230, %v1404
    %v1406 = vmul.f32 %v231, %v1404
    %v1407 = vmul.f32 %v232, %v1404
    %v1408 = vmul.f32 %v233, %v1404
    %v1409 = vrcp.pop %v1353
    %v1410 = vmul.f32 %v234, %v1409
    %v1411 = vmul.f32 %v235, %v1409
    %v1412 = vmul.f32 %v236, %v1409
    %v1413 = vmul.f32 %v237, %v1409
    %v1414 = vrcp.pop %v1354
    %v1415 = vmul.f32 %v238, %v1414
    %v1416 = vmul.f32 %v239, %v1414
    %v1417 = vmul.f32 %v240, %v1414
    %v1418 = vmul.f32 %v241, %v1414
    %v1419 = vrcp.pop %v1355
    %v1420 = vmul.f32 %v242, %v1419
    %v1421 = vmul.f32 %v243, %v1419
    %v1422 = vmul.f32 %v244, %v1419
    %v1423 = vmul.f32 %v245, %v1419
    %v1424 = vrcp.pop %v1356
    %v1425 = vmul.f32 %v246, %v1424
    %v1426 = vmul.f32 %v247, %v1424
    %v1427 = vmul.f32 %v248, %v1424
    %v1428 = vmul.f32 %v249, %v1424
    %v1429 = vrcp.pop %v1357
    %v1430 = vmul.f32 %v250, %v1429
    %v1431 = vmul.f32 %v251, %v1429
    %v1432 = vmul.f32 %v252, %v1429
    %v1433 = vmul.f32 %v253, %v1429
    %v1434 = vrcp.pop %v1358
    %v1435 = vmul.f32 %v254, %v1434
    %v1436 = vmul.f32 %v255, %v1434
    %v1437 = vmul.f32 %v256, %v1434
    %v1438 = vmul.f32 %v257, %v1434
    %v1439 = vmul.f32 %v999, %v999
    %v1440 = vmul.f32 %v1001, %v1001
    %v1441 = vmul.f32 %v1081, %v1081
    %v1442 = vmul.f32 %v1083, %v1083
    %v1443 = vadd.f32 %v1439, %v1440
    %v1444 = vadd.f32 %v1443, %v1441
    %v1445 = vadd.f32 %v1444, %v1442
    %1446 = vadd.xlane.f32.xlu0 %v1445
    %v1447 = vpop.xlane.xlu0 %1446
    %v1448 = vrsqrt.pop %v1447
    %v1449 = vmul.f32 %v1447, %v1448
    %vm1450 = vcmp.eq.f32.partialorder %v1447, inf
    %v1451 = vsel %vm1450, %v1447, %v1449
    %vm1452 = vcmp.eq.f32.partialorder %v1447, 0.0
    %v1453 = vand.u32 %v1447, 2147483648
    %v1454 = vsel %vm1452, %v1453, %v1451
    %v1455 = vmax.f32 %v1454, 1e-12
    %v1456 = vrcp.pop %v1455
    %v1457 = vmul.f32 %v999, %v1456
    %v1458 = vmul.f32 %v1001, %v1456
    %v1459 = vmul.f32 %v1081, %v1456
    %v1460 = vmul.f32 %v1083, %v1456
    %1461 = vxpose.xlu0.b32.start [1/16] %v1360, 128
    %1462 = vxpose.xlu0.b32.cont [2/16] %v1365, 128
    %1463 = vxpose.xlu0.b32.cont [3/16] %v1370, 128
    %1464 = vxpose.xlu0.b32.cont [4/16] %v1375, 128
    %1465 = vxpose.xlu0.b32.cont [5/16] %v1380, 128
    %1466 = vxpose.xlu0.b32.cont [6/16] %v1385, 128
    %1467 = vxpose.xlu0.b32.cont [7/16] %v1390, 128
    %1468 = vxpose.xlu0.b32.cont [8/16] %v1395, 128
    %1469 = vxpose.xlu0.b32.cont [9/16] %v1400, 128
    %1470 = vxpose.xlu0.b32.cont [10/16] %v1405, 128
    %1471 = vxpose.xlu0.b32.cont [11/16] %v1410, 128
    %1472 = vxpose.xlu0.b32.cont [12/16] %v1415, 128
    %1473 = vxpose.xlu0.b32.cont [13/16] %v1420, 128
    %1474 = vxpose.xlu0.b32.cont [14/16] %v1425, 128
    %1475 = vxpose.xlu0.b32.cont [15/16] %v1430, 128
    %1476 = vxpose.xlu0.b32.end [16/16] %v1435, 128
    %v1477 = vpop.trf.xlu0
    %v1478 = vpop.trf.xlu0
    %v1479 = vpop.trf.xlu0
    %v1480 = vpop.trf.xlu0
    %v1481 = vpop.trf.xlu0
    %v1482 = vpop.trf.xlu0
    %v1483 = vpop.trf.xlu0
    %v1484 = vpop.trf.xlu0
    %v1485 = vpop.trf.xlu0
    %v1486 = vpop.trf.xlu0
    %v1487 = vpop.trf.xlu0
    %v1488 = vpop.trf.xlu0
    %v1489 = vpop.trf.xlu0
    %v1490 = vpop.trf.xlu0
    %v1491 = vpop.trf.xlu0
    %v1492 = vpop.trf.xlu0
    %1493 = vxpose.xlu0.b32.start [1/16] %v1361, 128
    %1494 = vxpose.xlu0.b32.cont [2/16] %v1366, 128
    %1495 = vxpose.xlu0.b32.cont [3/16] %v1371, 128
    %1496 = vxpose.xlu0.b32.cont [4/16] %v1376, 128
    %1497 = vxpose.xlu0.b32.cont [5/16] %v1381, 128
    %1498 = vxpose.xlu0.b32.cont [6/16] %v1386, 128
    %1499 = vxpose.xlu0.b32.cont [7/16] %v1391, 128
    %1500 = vxpose.xlu0.b32.cont [8/16] %v1396, 128
    %1501 = vxpose.xlu0.b32.cont [9/16] %v1401, 128
    %1502 = vxpose.xlu0.b32.cont [10/16] %v1406, 128
    %1503 = vxpose.xlu0.b32.cont [11/16] %v1411, 128
    %1504 = vxpose.xlu0.b32.cont [12/16] %v1416, 128
    %1505 = vxpose.xlu0.b32.cont [13/16] %v1421, 128
    %1506 = vxpose.xlu0.b32.cont [14/16] %v1426, 128
    %1507 = vxpose.xlu0.b32.cont [15/16] %v1431, 128
    %1508 = vxpose.xlu0.b32.end [16/16] %v1436, 128
    %v1509 = vpop.trf.xlu0
    %v1510 = vpop.trf.xlu0
    %v1511 = vpop.trf.xlu0
    %v1512 = vpop.trf.xlu0
    %v1513 = vpop.trf.xlu0
    %v1514 = vpop.trf.xlu0
    %v1515 = vpop.trf.xlu0
    %v1516 = vpop.trf.xlu0
    %v1517 = vpop.trf.xlu0
    %v1518 = vpop.trf.xlu0
    %v1519 = vpop.trf.xlu0
    %v1520 = vpop.trf.xlu0
    %v1521 = vpop.trf.xlu0
    %v1522 = vpop.trf.xlu0
    %v1523 = vpop.trf.xlu0
    %v1524 = vpop.trf.xlu0
    %1525 = vxpose.xlu0.b32.start [1/16] %v1362, 128
    %1526 = vxpose.xlu0.b32.cont [2/16] %v1367, 128
    %1527 = vxpose.xlu0.b32.cont [3/16] %v1372, 128
    %1528 = vxpose.xlu0.b32.cont [4/16] %v1377, 128
    %1529 = vxpose.xlu0.b32.cont [5/16] %v1382, 128
    %1530 = vxpose.xlu0.b32.cont [6/16] %v1387, 128
    %1531 = vxpose.xlu0.b32.cont [7/16] %v1392, 128
    %1532 = vxpose.xlu0.b32.cont [8/16] %v1397, 128
    %1533 = vxpose.xlu0.b32.cont [9/16] %v1402, 128
    %1534 = vxpose.xlu0.b32.cont [10/16] %v1407, 128
    %1535 = vxpose.xlu0.b32.cont [11/16] %v1412, 128
    %1536 = vxpose.xlu0.b32.cont [12/16] %v1417, 128
    %1537 = vxpose.xlu0.b32.cont [13/16] %v1422, 128
    %1538 = vxpose.xlu0.b32.cont [14/16] %v1427, 128
    %1539 = vxpose.xlu0.b32.cont [15/16] %v1432, 128
    %1540 = vxpose.xlu0.b32.end [16/16] %v1437, 128
    %v1541 = vpop.trf.xlu0
    %v1542 = vpop.trf.xlu0
    %v1543 = vpop.trf.xlu0
    %v1544 = vpop.trf.xlu0
    %v1545 = vpop.trf.xlu0
    %v1546 = vpop.trf.xlu0
    %v1547 = vpop.trf.xlu0
    %v1548 = vpop.trf.xlu0
    %v1549 = vpop.trf.xlu0
    %v1550 = vpop.trf.xlu0
    %v1551 = vpop.trf.xlu0
    %v1552 = vpop.trf.xlu0
    %v1553 = vpop.trf.xlu0
    %v1554 = vpop.trf.xlu0
    %v1555 = vpop.trf.xlu0
    %v1556 = vpop.trf.xlu0
    %1557 = vxpose.xlu0.b32.start [1/16] %v1363, 128
    %1558 = vxpose.xlu0.b32.cont [2/16] %v1368, 128
    %1559 = vxpose.xlu0.b32.cont [3/16] %v1373, 128
    %1560 = vxpose.xlu0.b32.cont [4/16] %v1378, 128
    %1561 = vxpose.xlu0.b32.cont [5/16] %v1383, 128
    %1562 = vxpose.xlu0.b32.cont [6/16] %v1388, 128
    %1563 = vxpose.xlu0.b32.cont [7/16] %v1393, 128
    %1564 = vxpose.xlu0.b32.cont [8/16] %v1398, 128
    %1565 = vxpose.xlu0.b32.cont [9/16] %v1403, 128
    %1566 = vxpose.xlu0.b32.cont [10/16] %v1408, 128
    %1567 = vxpose.xlu0.b32.cont [11/16] %v1413, 128
    %1568 = vxpose.xlu0.b32.cont [12/16] %v1418, 128
    %1569 = vxpose.xlu0.b32.cont [13/16] %v1423, 128
    %1570 = vxpose.xlu0.b32.cont [14/16] %v1428, 128
    %1571 = vxpose.xlu0.b32.cont [15/16] %v1433, 128
    %1572 = vxpose.xlu0.b32.end [16/16] %v1438, 128
    %v1573 = vpop.trf.xlu0
    %v1574 = vpop.trf.xlu0
    %v1575 = vpop.trf.xlu0
    %v1576 = vpop.trf.xlu0
    %v1577 = vpop.trf.xlu0
    %v1578 = vpop.trf.xlu0
    %v1579 = vpop.trf.xlu0
    %v1580 = vpop.trf.xlu0
    %v1581 = vpop.trf.xlu0
    %v1582 = vpop.trf.xlu0
    %v1583 = vpop.trf.xlu0
    %v1584 = vpop.trf.xlu0
    %v1585 = vpop.trf.xlu0
    %v1586 = vpop.trf.xlu0
    %v1587 = vpop.trf.xlu0
    %v1588 = vpop.trf.xlu0
    %v1589 = vpack.c.bf16 %v1478, %v1477
    %v1590 = vpack.c.bf16 %v1480, %v1479
    %v1591 = vpack.c.bf16 %v1482, %v1481
    %v1592 = vpack.c.bf16 %v1484, %v1483
    %v1593 = vpack.c.bf16 %v1486, %v1485
    %v1594 = vpack.c.bf16 %v1488, %v1487
    %v1595 = vpack.c.bf16 %v1490, %v1489
    %v1596 = vpack.c.bf16 %v1492, %v1491
    %v1597 = vpack.c.bf16 %v1510, %v1509
    %v1598 = vpack.c.bf16 %v1512, %v1511
    %v1599 = vpack.c.bf16 %v1514, %v1513
    %v1600 = vpack.c.bf16 %v1516, %v1515
    %v1601 = vpack.c.bf16 %v1518, %v1517
    %v1602 = vpack.c.bf16 %v1520, %v1519
    %v1603 = vpack.c.bf16 %v1522, %v1521
    %v1604 = vpack.c.bf16 %v1524, %v1523
    %v1605 = vpack.c.bf16 %v1542, %v1541
    %v1606 = vpack.c.bf16 %v1544, %v1543
    %v1607 = vpack.c.bf16 %v1546, %v1545
    %v1608 = vpack.c.bf16 %v1548, %v1547
    %v1609 = vpack.c.bf16 %v1550, %v1549
    %v1610 = vpack.c.bf16 %v1552, %v1551
    %v1611 = vpack.c.bf16 %v1554, %v1553
    %v1612 = vpack.c.bf16 %v1556, %v1555
    %v1613 = vpack.c.bf16 %v1574, %v1573
    %v1614 = vpack.c.bf16 %v1576, %v1575
    %v1615 = vpack.c.bf16 %v1578, %v1577
    %v1616 = vpack.c.bf16 %v1580, %v1579
    %v1617 = vpack.c.bf16 %v1582, %v1581
    %v1618 = vpack.c.bf16 %v1584, %v1583
    %v1619 = vpack.c.bf16 %v1586, %v1585
    %v1620 = vpack.c.bf16 %v1588, %v1587
    %v1621 = vpack.c.bf16 %v1457, %v1457
    %v1622 = vpack.c.bf16 %v1458, %v1458
    %v1623 = vpack.c.bf16 %v1459, %v1459
    %v1624 = vpack.c.bf16 %v1460, %v1460
    %1625 = vmatprep.subr.bf16.mxu0 0
    %1626 = vmatpush1.bf16.msra.mxu0 %v1589
    %1627 = vmatprep.subr.bf16.mxu0 0
    %1628 = vmatpush1.bf16.msra.mxu0 %v1590
    %1629 = vmatprep.subr.bf16.mxu0 0
    %1630 = vmatpush1.bf16.msra.mxu0 %v1591
    %1631 = vmatprep.subr.bf16.mxu0 0
    %1632 = vmatpush1.bf16.msra.mxu0 %v1592
    %1633 = vmatprep.subr.bf16.mxu0 0
    %1634 = vmatpush1.bf16.msra.mxu0 %v1593
    %1635 = vmatprep.subr.bf16.mxu0 0
    %1636 = vmatpush1.bf16.msra.mxu0 %v1594
    %1637 = vmatprep.subr.bf16.mxu0 0
    %1638 = vmatpush1.bf16.msra.mxu0 %v1595
    %1639 = vmatprep.subr.bf16.mxu0 0
    %1640 = vmatpush1.bf16.msra.mxu0 %v1596
    %1641 = vmatprep.subr.bf16.mxu0 0
    %1642 = vmatpush1.bf16.msra.mxu0 %v1597
    %1643 = vmatprep.subr.bf16.mxu0 0
    %1644 = vmatpush1.bf16.msra.mxu0 %v1598
    %1645 = vmatprep.subr.bf16.mxu0 0
    %1646 = vmatpush1.bf16.msra.mxu0 %v1599
    %1647 = vmatprep.subr.bf16.mxu0 0
    %1648 = vmatpush1.bf16.msra.mxu0 %v1600
    %1649 = vmatprep.subr.bf16.mxu0 0
    %1650 = vmatpush1.bf16.msra.mxu0 %v1601
    %1651 = vmatprep.subr.bf16.mxu0 0
    %1652 = vmatpush1.bf16.msra.mxu0 %v1602
    %1653 = vmatprep.subr.bf16.mxu0 0
    %1654 = vmatpush1.bf16.msra.mxu0 %v1603
    %1655 = vmatprep.subr.bf16.mxu0 0
    %1656 = vmatpush1.bf16.msra.mxu0 %v1604
    %1657 = vmatprep.mubr.bf16.mxu0 %v1622
    %1658 = vmatmul.mubr.bf16.gmra.mrb[0].mxu0 %v1621
    %v1659 = vpop.f32.mrb[0].mxu0
    %v1660 = vadd.f32 0.0, %v1659
    %v1661 = vpop.f32.mrb[0].mxu0
    %v1662 = vpop.f32.mrb[0].mxu0
    %v1663 = vpop.f32.mrb[0].mxu0
    %1664 = vdwg.mxu0
    %1665 = vmatprep.subr.bf16.mxu0 0
    %1666 = vmatpush1.bf16.msra.mxu0 %v1605
    %1667 = vmatprep.subr.bf16.mxu0 0
    %1668 = vmatpush1.bf16.msra.mxu0 %v1606
    %1669 = vmatprep.subr.bf16.mxu0 0
    %1670 = vmatpush1.bf16.msra.mxu0 %v1607
    %1671 = vmatprep.subr.bf16.mxu0 0
    %1672 = vmatpush1.bf16.msra.mxu0 %v1608
    %1673 = vmatprep.subr.bf16.mxu0 0
    %1674 = vmatpush1.bf16.msra.mxu0 %v1609
    %1675 = vmatprep.subr.bf16.mxu0 0
    %1676 = vmatpush1.bf16.msra.mxu0 %v1610
    %1677 = vmatprep.subr.bf16.mxu0 0
    %1678 = vmatpush1.bf16.msra.mxu0 %v1611
    %1679 = vmatprep.subr.bf16.mxu0 0
    %1680 = vmatpush1.bf16.msra.mxu0 %v1612
    %1681 = vmatprep.subr.bf16.mxu0 0
    %1682 = vmatpush1.bf16.msra.mxu0 %v1613
    %1683 = vmatprep.subr.bf16.mxu0 0
    %1684 = vmatpush1.bf16.msra.mxu0 %v1614
    %1685 = vmatprep.subr.bf16.mxu0 0
    %1686 = vmatpush1.bf16.msra.mxu0 %v1615
    %1687 = vmatprep.subr.bf16.mxu0 0
    %1688 = vmatpush1.bf16.msra.mxu0 %v1616
    %1689 = vmatprep.subr.bf16.mxu0 0
    %1690 = vmatpush1.bf16.msra.mxu0 %v1617
    %1691 = vmatprep.subr.bf16.mxu0 0
    %1692 = vmatpush1.bf16.msra.mxu0 %v1618
    %1693 = vmatprep.subr.bf16.mxu0 0
    %1694 = vmatpush1.bf16.msra.mxu0 %v1619
    %1695 = vmatprep.subr.bf16.mxu0 0
    %1696 = vmatpush1.bf16.msra.mxu0 %v1620
    %1697 = vmatprep.mubr.bf16.mxu0 %v1624
    %1698 = vmatmul.mubr.bf16.gmra.mrb[0].mxu0 %v1623
    %v1699 = vpop.f32.mrb[0].mxu0
    %v1700 = vadd.f32 %v1660, %v1699
    %v1701 = vpop.f32.mrb[0].mxu0
    %v1702 = vpop.f32.mrb[0].mxu0
    %v1703 = vpop.f32.mrb[0].mxu0
    %1704 = vdwg.mxu0
    %v1705 = vmul.f32 %v1700, 16.0
    %v1706 = vlaneseq
    %v1707 = vand.u32 %v1706, 127
    %vm1708 = vcmp.lt.s32.totalorder %v1707, 112
    %v1709 = vmul.f32 %v1705, 1.442695
    %v1710 = vpow.pop %v1709
    %v1711 = vsel %vm1708, %v1710, 0.0
    %1712 = vadd.xlane.f32.xlu0 %v1711
    %v1713 = vpop.xlane.xlu0 %1712
    %v1714 = vrcp.pop %v1713
    %v1715 = vmul.f32 %v1711, %v1714
    %v1716 = vpack.c.bf16 %v1715, %v1715
    %v1717 = vpack.c.bf16 %v198, %v194
    %v1718 = vpack.c.bf16 %v199, %v195
    %v1719 = vpack.c.bf16 %v200, %v196
    %v1720 = vpack.c.bf16 %v201, %v197
    %v1721 = vpack.c.bf16 %v206, %v202
    %v1722 = vpack.c.bf16 %v207, %v203
    %v1723 = vpack.c.bf16 %v208, %v204
    %v1724 = vpack.c.bf16 %v209, %v205
    %v1725 = vpack.c.bf16 %v214, %v210
    %v1726 = vpack.c.bf16 %v215, %v211
    %v1727 = vpack.c.bf16 %v216, %v212
    %v1728 = vpack.c.bf16 %v217, %v213
    %v1729 = vpack.c.bf16 %v222, %v218
    %v1730 = vpack.c.bf16 %v223, %v219
    %v1731 = vpack.c.bf16 %v224, %v220
    %v1732 = vpack.c.bf16 %v225, %v221
    %v1733 = vpack.c.bf16 %v230, %v226
    %v1734 = vpack.c.bf16 %v231, %v227
    %v1735 = vpack.c.bf16 %v232, %v228
    %v1736 = vpack.c.bf16 %v233, %v229
    %v1737 = vpack.c.bf16 %v238, %v234
    %v1738 = vpack.c.bf16 %v239, %v235
    %v1739 = vpack.c.bf16 %v240, %v236
    %v1740 = vpack.c.bf16 %v241, %v237
    %v1741 = vpack.c.bf16 %v246, %v242
    %v1742 = vpack.c.bf16 %v247, %v243
    %v1743 = vpack.c.bf16 %v248, %v244
    %v1744 = vpack.c.bf16 %v249, %v245
    %v1745 = vpack.c.bf16 %v254, %v250
    %v1746 = vpack.c.bf16 %v255, %v251
    %v1747 = vpack.c.bf16 %v256, %v252
    %v1748 = vpack.c.bf16 %v257, %v253
    %1749 = vmatprep.subr.bf16.mxu0 %v1718
    %1750 = vmatpush1.bf16.msra.mxu0 %v1717
    %1751 = vmatprep.subr.bf16.mxu0 %v1722
    %1752 = vmatpush1.bf16.msra.mxu0 %v1721
    %1753 = vmatprep.subr.bf16.mxu0 %v1726
    %1754 = vmatpush1.bf16.msra.mxu0 %v1725
    %1755 = vmatprep.subr.bf16.mxu0 %v1730
    %1756 = vmatpush1.bf16.msra.mxu0 %v1729
    %1757 = vmatprep.subr.bf16.mxu0 %v1734
    %1758 = vmatpush1.bf16.msra.mxu0 %v1733
    %1759 = vmatprep.subr.bf16.mxu0 %v1738
    %1760 = vmatpush1.bf16.msra.mxu0 %v1737
    %1761 = vmatprep.subr.bf16.mxu0 %v1742
    %1762 = vmatpush1.bf16.msra.mxu0 %v1741
    %1763 = vmatprep.subr.bf16.mxu0 %v1746
    %1764 = vmatpush1.bf16.msra.mxu0 %v1745
    %1765 = vmatprep.subr.bf16.mxu0 0
    %1766 = vmatpush1.bf16.msra.mxu0 0
    %1767 = vmatprep.subr.bf16.mxu0 0
    %1768 = vmatpush1.bf16.msra.mxu0 0
    %1769 = vmatprep.subr.bf16.mxu0 0
    %1770 = vmatpush1.bf16.msra.mxu0 0
    %1771 = vmatprep.subr.bf16.mxu0 0
    %1772 = vmatpush1.bf16.msra.mxu0 0
    %1773 = vmatprep.subr.bf16.mxu0 0
    %1774 = vmatpush1.bf16.msra.mxu0 0
    %1775 = vmatprep.subr.bf16.mxu0 0
    %1776 = vmatpush1.bf16.msra.mxu0 0
    %1777 = vmatprep.subr.bf16.mxu0 0
    %1778 = vmatpush1.bf16.msra.mxu0 0
    %1779 = vmatprep.subr.bf16.mxu0 0
    %1780 = vmatpush1.bf16.msra.mxu0 0
    %1781 = vmatprep.mubr.bf16.mxu0 0
    %1782 = vmatmul.mubr.bf16.gmra.mrb[0].mxu0 %v1716
    %v1783 = vpop.f32.mrb[0].mxu0
    %v1784 = vadd.f32 0.0, %v1783
    %v1785 = vpop.f32.mrb[0].mxu0
    %v1786 = vadd.f32 0.0, %v1785
    %v1787 = vpop.f32.mrb[0].mxu0
    %v1788 = vpop.f32.mrb[0].mxu0
    %1789 = vdwg.mxu0
    %1790 = vmatprep.subr.bf16.mxu0 %v1720
    %1791 = vmatpush1.bf16.msra.mxu0 %v1719
    %1792 = vmatprep.subr.bf16.mxu0 %v1724
    %1793 = vmatpush1.bf16.msra.mxu0 %v1723
    %1794 = vmatprep.subr.bf16.mxu0 %v1728
    %1795 = vmatpush1.bf16.msra.mxu0 %v1727
    %1796 = vmatprep.subr.bf16.mxu0 %v1732
    %1797 = vmatpush1.bf16.msra.mxu0 %v1731
    %1798 = vmatprep.subr.bf16.mxu0 %v1736
    %1799 = vmatpush1.bf16.msra.mxu0 %v1735
    %1800 = vmatprep.subr.bf16.mxu0 %v1740
    %1801 = vmatpush1.bf16.msra.mxu0 %v1739
    %1802 = vmatprep.subr.bf16.mxu0 %v1744
    %1803 = vmatpush1.bf16.msra.mxu0 %v1743
    %1804 = vmatprep.subr.bf16.mxu0 %v1748
    %1805 = vmatpush1.bf16.msra.mxu0 %v1747
    %1806 = vmatprep.subr.bf16.mxu0 0
    %1807 = vmatpush1.bf16.msra.mxu0 0
    %1808 = vmatprep.subr.bf16.mxu0 0
    %1809 = vmatpush1.bf16.msra.mxu0 0
    %1810 = vmatprep.subr.bf16.mxu0 0
    %1811 = vmatpush1.bf16.msra.mxu0 0
    %1812 = vmatprep.subr.bf16.mxu0 0
    %1813 = vmatpush1.bf16.msra.mxu0 0
    %1814 = vmatprep.subr.bf16.mxu0 0
    %1815 = vmatpush1.bf16.msra.mxu0 0
    %1816 = vmatprep.subr.bf16.mxu0 0
    %1817 = vmatpush1.bf16.msra.mxu0 0
    %1818 = vmatprep.subr.bf16.mxu0 0
    %1819 = vmatpush1.bf16.msra.mxu0 0
    %1820 = vmatprep.subr.bf16.mxu0 0
    %1821 = vmatpush1.bf16.msra.mxu0 0
    %1822 = vmatprep.mubr.bf16.mxu0 0
    %1823 = vmatmul.mubr.bf16.gmra.mrb[0].mxu0 %v1716
    %v1824 = vpop.f32.mrb[0].mxu0
    %v1825 = vadd.f32 0.0, %v1824
    %v1826 = vpop.f32.mrb[0].mxu0
    %v1827 = vadd.f32 0.0, %v1826
    %v1828 = vpop.f32.mrb[0].mxu0
    %v1829 = vpop.f32.mrb[0].mxu0
    %1830 = vdwg.mxu0
    %1831 = vst [vmem:[#allocation8] sm:$0xff] %v1784
    %1832 = vst [vmem:[#allocation8 + $0x8] sm:$0xff] %v1786
    %1833 = vst [vmem:[#allocation8 + $0x10] sm:$0xff] %v1825
    %1834 = vst [vmem:[#allocation8 + $0x18] sm:$0xff] %v1827
    %v1835 = vmul.f32 %v1784, %v61
    %v1836 = vmul.f32 %v1786, %v62
    %v1837 = vmul.f32 %v1825, %v63
    %v1838 = vmul.f32 %v1827, %v64
    %v1839 = vadd.f32 %v1835, %v1836
    %v1840 = vadd.f32 %v1839, %v1837
    %v1841 = vadd.f32 %v1840, %v1838
    %1842 = vadd.xlane.f32.xlu0 %v1841
    %v1843 = vpop.xlane.xlu0 %1842
    %v1844 = vmul.f32 %v1784, %v1784
    %v1845 = vmul.f32 %v1786, %v1786
    %v1846 = vmul.f32 %v1825, %v1825
    %v1847 = vmul.f32 %v1827, %v1827
    %v1848 = vadd.f32 %v1844, %v1845
    %v1849 = vadd.f32 %v1848, %v1846
    %v1850 = vadd.f32 %v1849, %v1847
    %1851 = vadd.xlane.f32.xlu0 %v1850
    %v1852 = vpop.xlane.xlu0 %1851
    %v1853 = vrsqrt.pop %v1852
    %v1854 = vmul.f32 %v1852, %v1853
    %vm1855 = vcmp.eq.f32.partialorder %v1852, inf
    %v1856 = vsel %vm1855, %v1852, %v1854
    %vm1857 = vcmp.eq.f32.partialorder %v1852, 0.0
    %v1858 = vand.u32 %v1852, 2147483648
    %v1859 = vsel %vm1857, %v1858, %v1856
    %v1860 = vmul.f32 %v61, %v61
    %v1861 = vmul.f32 %v62, %v62
    %v1862 = vmul.f32 %v63, %v63
    %v1863 = vmul.f32 %v64, %v64
    %v1864 = vadd.f32 %v1860, %v1861
    %v1865 = vadd.f32 %v1864, %v1862
    %v1866 = vadd.f32 %v1865, %v1863
    %1867 = vadd.xlane.f32.xlu0 %v1866
    %v1868 = vpop.xlane.xlu0 %1867
    %v1869 = vrsqrt.pop %v1868
    %v1870 = vmul.f32 %v1868, %v1869
    %vm1871 = vcmp.eq.f32.partialorder %v1868, inf
    %v1872 = vsel %vm1871, %v1868, %v1870
    %vm1873 = vcmp.eq.f32.partialorder %v1868, 0.0
    %v1874 = vand.u32 %v1868, 2147483648
    %v1875 = vsel %vm1873, %v1874, %v1872
    %v1876 = vmul.f32 %v1859, %v1875
    %v1877 = vmax.f32 %v1876, 1e-08
    %v1878 = vrcp.pop %v1877
    %v1879 = vmul.f32 %v1843, %v1878
    %v1880 = vlaneseq
    %v1881 = vshrl.u32 %v1880, 7
    %s1882 = smul.u32 0, 8
    %v1883 = vstv %s1882
    %v1884 = vadd.s32 %v1881, %v1883
    %vm1885 = vcmp.lt.s32.totalorder %v1884, 8
    %v1886 = vsub.f32 1.0, %v1879
    %v1887 = vand.u32 2147483647, %v1886
    %v1888 = vsel %vm1885, %v1887, 0.0
    %v1889 = vrot.slane %v1888, 4
    %v1890 = vadd.f32 %v1888, %v1889
    %v1891 = vrot.slane %v1890, 2
    %v1892 = vadd.f32 %v1890, %v1891
    %v1893 = vrot.slane %v1892, 1
    %v1894 = vadd.f32 %v1892, %v1893
    %vm1895 = vcmp.eq.s32.totalorder %v1881, 0
    %vm1896 = vcmp.eq.s32.totalorder %v1707, 0
    %vm1897 = vmand %vm1895, %vm1896
    %v1898 = vsel %vm1897, %v1894, 0.0
    %1899 = vst [vmem:[#allocation9] sm:$0xff] %v1898
    %p1900 = scmp.eq.s32.totalorder 0, 0
    // Predicated region
    $region30: #{tpu_custom_call.1} parent=1 // pred_check
      %p1901 = pneg %p1900
    $region31: #{tpu_custom_call.1} parent=1 // pred_check_branch
      %1903 = sbr.rel (%p1901) target = $region33
    $region32: #{tpu_custom_call.1} parent=1 // pred_region
      %v1904 = vpack.c.bf16 %v1365, %v1360
      %v1905 = vpack.c.bf16 %v1366, %v1361
      %v1906 = vpack.c.bf16 %v1367, %v1362
      %v1907 = vpack.c.bf16 %v1368, %v1363
      %v1908 = vpack.c.bf16 %v1375, %v1370
      %v1909 = vpack.c.bf16 %v1376, %v1371
      %v1910 = vpack.c.bf16 %v1377, %v1372
      %v1911 = vpack.c.bf16 %v1378, %v1373
      %v1912 = vpack.c.bf16 %v1385, %v1380
      %v1913 = vpack.c.bf16 %v1386, %v1381
      %v1914 = vpack.c.bf16 %v1387, %v1382
      %v1915 = vpack.c.bf16 %v1388, %v1383
      %v1916 = vpack.c.bf16 %v1395, %v1390
      %v1917 = vpack.c.bf16 %v1396, %v1391
      %v1918 = vpack.c.bf16 %v1397, %v1392
      %v1919 = vpack.c.bf16 %v1398, %v1393
      %v1920 = vpack.c.bf16 %v1405, %v1400
      %v1921 = vpack.c.bf16 %v1406, %v1401
      %v1922 = vpack.c.bf16 %v1407, %v1402
      %v1923 = vpack.c.bf16 %v1408, %v1403
      %v1924 = vpack.c.bf16 %v1415, %v1410
      %v1925 = vpack.c.bf16 %v1416, %v1411
      %v1926 = vpack.c.bf16 %v1417, %v1412
      %v1927 = vpack.c.bf16 %v1418, %v1413
      %v1928 = vpack.c.bf16 %v1425, %v1420
      %v1929 = vpack.c.bf16 %v1426, %v1421
      %v1930 = vpack.c.bf16 %v1427, %v1422
      %v1931 = vpack.c.bf16 %v1428, %v1423
      %v1932 = vpack.c.bf16 %v1435, %v1430
      %v1933 = vpack.c.bf16 %v1436, %v1431
      %v1934 = vpack.c.bf16 %v1437, %v1432
      %v1935 = vpack.c.bf16 %v1438, %v1433
      %1936 = vmatprep.subr.bf16.mxu0 0
      %1937 = vmatpush1.bf16.msra.mxu0 %v1589
      %1938 = vmatprep.subr.bf16.mxu0 0
      %1939 = vmatpush1.bf16.msra.mxu0 %v1590
      %1940 = vmatprep.subr.bf16.mxu0 0
      %1941 = vmatpush1.bf16.msra.mxu0 %v1591
      %1942 = vmatprep.subr.bf16.mxu0 0
      %1943 = vmatpush1.bf16.msra.mxu0 %v1592
      %1944 = vmatprep.subr.bf16.mxu0 0
      %1945 = vmatpush1.bf16.msra.mxu0 %v1593
      %1946 = vmatprep.subr.bf16.mxu0 0
      %1947 = vmatpush1.bf16.msra.mxu0 %v1594
      %1948 = vmatprep.subr.bf16.mxu0 0
      %1949 = vmatpush1.bf16.msra.mxu0 %v1595
      %1950 = vmatprep.subr.bf16.mxu0 0
      %1951 = vmatpush1.bf16.msra.mxu0 %v1596
      %1952 = vmatprep.subr.bf16.mxu0 0
      %1953 = vmatpush1.bf16.msra.mxu0 %v1597
      %1954 = vmatprep.subr.bf16.mxu0 0
      %1955 = vmatpush1.bf16.msra.mxu0 %v1598
      %1956 = vmatprep.subr.bf16.mxu0 0
      %1957 = vmatpush1.bf16.msra.mxu0 %v1599
      %1958 = vmatprep.subr.bf16.mxu0 0
      %1959 = vmatpush1.bf16.msra.mxu0 %v1600
      %1960 = vmatprep.subr.bf16.mxu0 0
      %1961 = vmatpush1.bf16.msra.mxu0 %v1601
      %1962 = vmatprep.subr.bf16.mxu0 0
      %1963 = vmatpush1.bf16.msra.mxu0 %v1602
      %1964 = vmatprep.subr.bf16.mxu0 0
      %1965 = vmatpush1.bf16.msra.mxu0 %v1603
      %1966 = vmatprep.subr.bf16.mxu0 0
      %1967 = vmatpush1.bf16.msra.mxu0 %v1604
      %1968 = vmatprep.mubr.bf16.mxu0 %v1905
      %1969 = vmatmul.mubr.bf16.gmra.mrb[0].mxu0 %v1904
      %v1970 = vpop.f32.mrb[0].mxu0
      %v1971 = vadd.f32 0.0, %v1970
      %v1972 = vpop.f32.mrb[0].mxu0
      %v1973 = vpop.f32.mrb[0].mxu0
      %v1974 = vadd.f32 0.0, %v1973
      %v1975 = vpop.f32.mrb[0].mxu0
      %1976 = vmatprep.mubr.bf16.mxu0 %v1909
      %1977 = vmatmul.mubr.bf16.gmra.mrb[0].mxu0 %v1908
      %v1978 = vpop.f32.mrb[0].mxu0
      %v1979 = vadd.f32 0.0, %v1978
      %v1980 = vpop.f32.mrb[0].mxu0
      %v1981 = vpop.f32.mrb[0].mxu0
      %v1982 = vadd.f32 0.0, %v1981
      %v1983 = vpop.f32.mrb[0].mxu0
      %1984 = vmatprep.mubr.bf16.mxu0 %v1913
      %1985 = vmatmul.mubr.bf16.gmra.mrb[0].mxu0 %v1912
      %v1986 = vpop.f32.mrb[0].mxu0
      %v1987 = vadd.f32 0.0, %v1986
      %v1988 = vpop.f32.mrb[0].mxu0
      %v1989 = vpop.f32.mrb[0].mxu0
      %v1990 = vadd.f32 0.0, %v1989
      %v1991 = vpop.f32.mrb[0].mxu0
      %1992 = vmatprep.mubr.bf16.mxu0 %v1917
      %1993 = vmatmul.mubr.bf16.gmra.mrb[0].mxu0 %v1916
      %v1994 = vpop.f32.mrb[0].mxu0
      %v1995 = vadd.f32 0.0, %v1994
      %v1996 = vpop.f32.mrb[0].mxu0
      %v1997 = vpop.f32.mrb[0].mxu0
      %v1998 = vadd.f32 0.0, %v1997
      %v1999 = vpop.f32.mrb[0].mxu0
      %2000 = vmatprep.mubr.bf16.mxu0 %v1921
      %2001 = vmatmul.mubr.bf16.gmra.mrb[0].mxu0 %v1920
      %v2002 = vpop.f32.mrb[0].mxu0
      %v2003 = vadd.f32 0.0, %v2002
      %v2004 = vpop.f32.mrb[0].mxu0
      %v2005 = vpop.f32.mrb[0].mxu0
      %v2006 = vadd.f32 0.0, %v2005
      %v2007 = vpop.f32.mrb[0].mxu0
      %2008 = vmatprep.mubr.bf16.mxu0 %v1925
      %2009 = vmatmul.mubr.bf16.gmra.mrb[0].mxu0 %v1924
      %v2010 = vpop.f32.mrb[0].mxu0
      %v2011 = vadd.f32 0.0, %v2010
      %v2012 = vpop.f32.mrb[0].mxu0
      %v2013 = vpop.f32.mrb[0].mxu0
      %v2014 = vadd.f32 0.0, %v2013
      %v2015 = vpop.f32.mrb[0].mxu0
      %2016 = vmatprep.mubr.bf16.mxu0 %v1929
      %2017 = vmatmul.mubr.bf16.gmra.mrb[0].mxu0 %v1928
      %v2018 = vpop.f32.mrb[0].mxu0
      %v2019 = vadd.f32 0.0, %v2018
      %v2020 = vpop.f32.mrb[0].mxu0
      %v2021 = vpop.f32.mrb[0].mxu0
      %v2022 = vadd.f32 0.0, %v2021
      %v2023 = vpop.f32.mrb[0].mxu0
      %2024 = vmatprep.mubr.bf16.mxu0 %v1933
      %2025 = vmatmul.mubr.bf16.gmra.mrb[0].mxu0 %v1932
      %v2026 = vpop.f32.mrb[0].mxu0
      %v2027 = vadd.f32 0.0, %v2026
      %v2028 = vpop.f32.mrb[0].mxu0
      %v2029 = vpop.f32.mrb[0].mxu0
      %v2030 = vadd.f32 0.0, %v2029
      %v2031 = vpop.f32.mrb[0].mxu0
      %2032 = vdwg.mxu0
      %2033 = vmatprep.subr.bf16.mxu0 0
      %2034 = vmatpush1.bf16.msra.mxu0 %v1605
      %2035 = vmatprep.subr.bf16.mxu0 0
      %2036 = vmatpush1.bf16.msra.mxu0 %v1606
      %2037 = vmatprep.subr.bf16.mxu0 0
      %2038 = vmatpush1.bf16.msra.mxu0 %v1607
      %2039 = vmatprep.subr.bf16.mxu0 0
      %2040 = vmatpush1.bf16.msra.mxu0 %v1608
      %2041 = vmatprep.subr.bf16.mxu0 0
      %2042 = vmatpush1.bf16.msra.mxu0 %v1609
      %2043 = vmatprep.subr.bf16.mxu0 0
      %2044 = vmatpush1.bf16.msra.mxu0 %v1610
      %2045 = vmatprep.subr.bf16.mxu0 0
      %2046 = vmatpush1.bf16.msra.mxu0 %v1611
      %2047 = vmatprep.subr.bf16.mxu0 0
      %2048 = vmatpush1.bf16.msra.mxu0 %v1612
      %2049 = vmatprep.subr.bf16.mxu0 0
      %2050 = vmatpush1.bf16.msra.mxu0 %v1613
      %2051 = vmatprep.subr.bf16.mxu0 0
      %2052 = vmatpush1.bf16.msra.mxu0 %v1614
      %2053 = vmatprep.subr.bf16.mxu0 0
      %2054 = vmatpush1.bf16.msra.mxu0 %v1615
      %2055 = vmatprep.subr.bf16.mxu0 0
      %2056 = vmatpush1.bf16.msra.mxu0 %v1616
      %2057 = vmatprep.subr.bf16.mxu0 0
      %2058 = vmatpush1.bf16.msra.mxu0 %v1617
      %2059 = vmatprep.subr.bf16.mxu0 0
      %2060 = vmatpush1.bf16.msra.mxu0 %v1618
      %2061 = vmatprep.subr.bf16.mxu0 0
      %2062 = vmatpush1.bf16.msra.mxu0 %v1619
      %2063 = vmatprep.subr.bf16.mxu0 0
      %2064 = vmatpush1.bf16.msra.mxu0 %v1620
      %2065 = vmatprep.mubr.bf16.mxu0 %v1907
      %2066 = vmatmul.mubr.bf16.gmra.mrb[0].mxu0 %v1906
      %v2067 = vpop.f32.mrb[0].mxu0
      %v2068 = vadd.f32 %v1971, %v2067
      %v2069 = vpop.f32.mrb[0].mxu0
      %v2070 = vpop.f32.mrb[0].mxu0
      %v2071 = vadd.f32 %v1974, %v2070
      %v2072 = vpop.f32.mrb[0].mxu0
      %2073 = vmatprep.mubr.bf16.mxu0 %v1911
      %2074 = vmatmul.mubr.bf16.gmra.mrb[0].mxu0 %v1910
      %v2075 = vpop.f32.mrb[0].mxu0
      %v2076 = vadd.f32 %v1979, %v2075
      %v2077 = vpop.f32.mrb[0].mxu0
      %v2078 = vpop.f32.mrb[0].mxu0
      %v2079 = vadd.f32 %v1982, %v2078
      %v2080 = vpop.f32.mrb[0].mxu0
      %2081 = vmatprep.mubr.bf16.mxu0 %v1915
      %2082 = vmatmul.mubr.bf16.gmra.mrb[0].mxu0 %v1914
      %v2083 = vpop.f32.mrb[0].mxu0
      %v2084 = vadd.f32 %v1987, %v2083
      %v2085 = vpop.f32.mrb[0].mxu0
      %v2086 = vpop.f32.mrb[0].mxu0
      %v2087 = vadd.f32 %v1990, %v2086
      %v2088 = vpop.f32.mrb[0].mxu0
      %2089 = vmatprep.mubr.bf16.mxu0 %v1919
      %2090 = vmatmul.mubr.bf16.gmra.mrb[0].mxu0 %v1918
      %v2091 = vpop.f32.mrb[0].mxu0
      %v2092 = vadd.f32 %v1995, %v2091
      %v2093 = vpop.f32.mrb[0].mxu0
      %v2094 = vpop.f32.mrb[0].mxu0
      %v2095 = vadd.f32 %v1998, %v2094
      %v2096 = vpop.f32.mrb[0].mxu0
      %2097 = vmatprep.mubr.bf16.mxu0 %v1923
      %2098 = vmatmul.mubr.bf16.gmra.mrb[0].mxu0 %v1922
      %v2099 = vpop.f32.mrb[0].mxu0
      %v2100 = vadd.f32 %v2003, %v2099
      %v2101 = vpop.f32.mrb[0].mxu0
      %v2102 = vpop.f32.mrb[0].mxu0
      %v2103 = vadd.f32 %v2006, %v2102
      %v2104 = vpop.f32.mrb[0].mxu0
      %2105 = vmatprep.mubr.bf16.mxu0 %v1927
      %2106 = vmatmul.mubr.bf16.gmra.mrb[0].mxu0 %v1926
      %v2107 = vpop.f32.mrb[0].mxu0
      %v2108 = vadd.f32 %v2011, %v2107
      %v2109 = vpop.f32.mrb[0].mxu0
      %v2110 = vpop.f32.mrb[0].mxu0
      %v2111 = vadd.f32 %v2014, %v2110
      %v2112 = vpop.f32.mrb[0].mxu0
      %2113 = vmatprep.mubr.bf16.mxu0 %v1931
      %2114 = vmatmul.mubr.bf16.gmra.mrb[0].mxu0 %v1930
      %v2115 = vpop.f32.mrb[0].mxu0
      %v2116 = vadd.f32 %v2019, %v2115
      %v2117 = vpop.f32.mrb[0].mxu0
      %v2118 = vpop.f32.mrb[0].mxu0
      %v2119 = vadd.f32 %v2022, %v2118
      %v2120 = vpop.f32.mrb[0].mxu0
      %2121 = vmatprep.mubr.bf16.mxu0 %v1935
      %2122 = vmatmul.mubr.bf16.gmra.mrb[0].mxu0 %v1934
      %v2123 = vpop.f32.mrb[0].mxu0
      %v2124 = vadd.f32 %v2027, %v2123
      %v2125 = vpop.f32.mrb[0].mxu0
      %v2126 = vpop.f32.mrb[0].mxu0
      %v2127 = vadd.f32 %v2030, %v2126
      %v2128 = vpop.f32.mrb[0].mxu0
      %2129 = vdwg.mxu0
      %v2130 = vadd.s32 %v1881, 8
      %v2131 = vadd.s32 %v1881, 16
      %v2132 = vadd.s32 %v1881, 24
      %v2133 = vadd.s32 %v1881, 32
      %v2134 = vadd.s32 %v1881, 40
      %v2135 = vadd.s32 %v1881, 48
      %v2136 = vadd.s32 %v1881, 56
      %v2137 = vadd.s32 %v1881, 64
      %v2138 = vadd.s32 %v1881, 72
      %v2139 = vadd.s32 %v1881, 80
      %v2140 = vadd.s32 %v1881, 88
      %v2141 = vadd.s32 %v1881, 96
      %v2142 = vadd.s32 %v1881, 104
      %v2143 = vadd.s32 %v1881, 112
      %v2144 = vadd.s32 %v1881, 120
      %vm2145 = vcmp.eq.s32.totalorder %v1881, %v1707
      %vm2146 = vcmp.eq.s32.totalorder %v2130, %v1707
      %vm2147 = vcmp.eq.s32.totalorder %v2131, %v1707
      %vm2148 = vcmp.eq.s32.totalorder %v2132, %v1707
      %vm2149 = vcmp.eq.s32.totalorder %v2133, %v1707
      %vm2150 = vcmp.eq.s32.totalorder %v2134, %v1707
      %vm2151 = vcmp.eq.s32.totalorder %v2135, %v1707
      %vm2152 = vcmp.eq.s32.totalorder %v2136, %v1707
      %vm2153 = vcmp.eq.s32.totalorder %v2137, %v1707
      %vm2154 = vcmp.eq.s32.totalorder %v2138, %v1707
      %vm2155 = vcmp.eq.s32.totalorder %v2139, %v1707
      %vm2156 = vcmp.eq.s32.totalorder %v2140, %v1707
      %vm2157 = vcmp.eq.s32.totalorder %v2141, %v1707
      %vm2158 = vcmp.eq.s32.totalorder %v2142, %v1707
      %vm2159 = vcmp.eq.s32.totalorder %v2143, %v1707
      %vm2160 = vcmp.eq.s32.totalorder %v2144, %v1707
      %vm2161 = vcmp.lt.s32.totalorder %v1881, 112
      %vm2162 = vcmp.lt.s32.totalorder %v2130, 112
      %vm2163 = vcmp.lt.s32.totalorder %v2131, 112
      %vm2164 = vcmp.lt.s32.totalorder %v2132, 112
      %vm2165 = vcmp.lt.s32.totalorder %v2133, 112
      %vm2166 = vcmp.lt.s32.totalorder %v2134, 112
      %vm2167 = vcmp.lt.s32.totalorder %v2135, 112
      %vm2168 = vcmp.lt.s32.totalorder %v2136, 112
      %vm2169 = vcmp.lt.s32.totalorder %v2137, 112
      %vm2170 = vcmp.lt.s32.totalorder %v2138, 112
      %vm2171 = vcmp.lt.s32.totalorder %v2139, 112
      %vm2172 = vcmp.lt.s32.totalorder %v2140, 112
      %vm2173 = vcmp.lt.s32.totalorder %v2141, 112
      %vm2174 = vcmp.lt.s32.totalorder %v2142, 112
      %vm2175 = vcmp.lt.s32.totalorder %v2143, 112
      %vm2176 = vcmp.lt.s32.totalorder %v2144, 112
      %vm2177 = vmand %vm2145, %vm2161
      %vm2178 = vmand %vm2146, %vm2162
      %vm2179 = vmand %vm2147, %vm2163
      %vm2180 = vmand %vm2148, %vm2164
      %vm2181 = vmand %vm2149, %vm2165
      %vm2182 = vmand %vm2150, %vm2166
      %vm2183 = vmand %vm2151, %vm2167
      %vm2184 = vmand %vm2152, %vm2168
      %vm2185 = vmand %vm2153, %vm2169
      %vm2186 = vmand %vm2154, %vm2170
      %vm2187 = vmand %vm2155, %vm2171
      %vm2188 = vmand %vm2156, %vm2172
      %vm2189 = vmand %vm2157, %vm2173
      %vm2190 = vmand %vm2158, %vm2174
      %vm2191 = vmand %vm2159, %vm2175
      %vm2192 = vmand %vm2160, %vm2176
      %v2193 = vsel %vm2177, 1, 0
      %v2194 = vsel %vm2178, 1, 0
      %v2195 = vsel %vm2179, 1, 0
      %v2196 = vsel %vm2180, 1, 0
      %v2197 = vsel %vm2181, 1, 0
      %v2198 = vsel %vm2182, 1, 0
      %v2199 = vsel %vm2183, 1, 0
      %v2200 = vsel %vm2184, 1, 0
      %v2201 = vsel %vm2185, 1, 0
      %v2202 = vsel %vm2186, 1, 0
      %v2203 = vsel %vm2187, 1, 0
      %v2204 = vsel %vm2188, 1, 0
      %v2205 = vsel %vm2189, 1, 0
      %v2206 = vsel %vm2190, 1, 0
      %v2207 = vsel %vm2191, 1, 0
      %v2208 = vsel %vm2192, 1, 0
      %v2209 = vcvt.s32.f32 %v2193
      %v2210 = vcvt.s32.f32 %v2194
      %v2211 = vcvt.s32.f32 %v2195
      %v2212 = vcvt.s32.f32 %v2196
      %v2213 = vcvt.s32.f32 %v2197
      %v2214 = vcvt.s32.f32 %v2198
      %v2215 = vcvt.s32.f32 %v2199
      %v2216 = vcvt.s32.f32 %v2200
      %v2217 = vcvt.s32.f32 %v2201
      %v2218 = vcvt.s32.f32 %v2202
      %v2219 = vcvt.s32.f32 %v2203
      %v2220 = vcvt.s32.f32 %v2204
      %v2221 = vcvt.s32.f32 %v2205
      %v2222 = vcvt.s32.f32 %v2206
      %v2223 = vcvt.s32.f32 %v2207
      %v2224 = vcvt.s32.f32 %v2208
      %v2225 = vsub.f32 %v2209, %v2068
      %v2226 = vsub.f32 %v2210, %v2071
      %v2227 = vsub.f32 %v2211, %v2076
      %v2228 = vsub.f32 %v2212, %v2079
      %v2229 = vsub.f32 %v2213, %v2084
      %v2230 = vsub.f32 %v2214, %v2087
      %v2231 = vsub.f32 %v2215, %v2092
      %v2232 = vsub.f32 %v2216, %v2095
      %v2233 = vsub.f32 %v2217, %v2100
      %v2234 = vsub.f32 %v2218, %v2103
      %v2235 = vsub.f32 %v2219, %v2108
      %v2236 = vsub.f32 %v2220, %v2111
      %v2237 = vsub.f32 %v2221, %v2116
      %v2238 = vsub.f32 %v2222, %v2119
      %v2239 = vsub.f32 %v2223, %v2124
      %v2240 = vsub.f32 %v2224, %v2127
      %v2241 = vand.u32 2147483647, %v2225
      %v2242 = vand.u32 2147483647, %v2226
      %v2243 = vand.u32 2147483647, %v2227
      %v2244 = vand.u32 2147483647, %v2228
      %v2245 = vand.u32 2147483647, %v2229
      %v2246 = vand.u32 2147483647, %v2230
      %v2247 = vand.u32 2147483647, %v2231
      %v2248 = vand.u32 2147483647, %v2232
      %v2249 = vand.u32 2147483647, %v2233
      %v2250 = vand.u32 2147483647, %v2234
      %v2251 = vand.u32 2147483647, %v2235
      %v2252 = vand.u32 2147483647, %v2236
      %v2253 = vand.u32 2147483647, %v2237
      %v2254 = vand.u32 2147483647, %v2238
      %v2255 = vand.u32 2147483647, %v2239
      %v2256 = vand.u32 2147483647, %v2240
      %2257 = vadd.xlane.f32.xlu0 %v2241
      %v2258 = vpop.xlane.xlu0 %2257
      %2259 = vadd.xlane.f32.xlu0 %v2242
      %v2260 = vpop.xlane.xlu0 %2259
      %2261 = vadd.xlane.f32.xlu0 %v2243
      %v2262 = vpop.xlane.xlu0 %2261
      %2263 = vadd.xlane.f32.xlu0 %v2244
      %v2264 = vpop.xlane.xlu0 %2263
      %2265 = vadd.xlane.f32.xlu0 %v2245
      %v2266 = vpop.xlane.xlu0 %2265
      %2267 = vadd.xlane.f32.xlu0 %v2246
      %v2268 = vpop.xlane.xlu0 %2267
      %2269 = vadd.xlane.f32.xlu0 %v2247
      %v2270 = vpop.xlane.xlu0 %2269
      %2271 = vadd.xlane.f32.xlu0 %v2248
      %v2272 = vpop.xlane.xlu0 %2271
      %2273 = vadd.xlane.f32.xlu0 %v2249
      %v2274 = vpop.xlane.xlu0 %2273
      %2275 = vadd.xlane.f32.xlu0 %v2250
      %v2276 = vpop.xlane.xlu0 %2275
      %2277 = vadd.xlane.f32.xlu0 %v2251
      %v2278 = vpop.xlane.xlu0 %2277
      %2279 = vadd.xlane.f32.xlu0 %v2252
      %v2280 = vpop.xlane.xlu0 %2279
      %2281 = vadd.xlane.f32.xlu0 %v2253
      %v2282 = vpop.xlane.xlu0 %2281
      %2283 = vadd.xlane.f32.xlu0 %v2254
      %v2284 = vpop.xlane.xlu0 %2283
      %2285 = vadd.xlane.f32.xlu0 %v2255
      %v2286 = vpop.xlane.xlu0 %2285
      %2287 = vadd.xlane.f32.xlu0 %v2256
      %v2288 = vpop.xlane.xlu0 %2287
      %v2289 = vadd.f32 %v2258, %v2260
      %v2290 = vadd.f32 %v2289, %v2262
      %v2291 = vadd.f32 %v2290, %v2264
      %v2292 = vadd.f32 %v2291, %v2266
      %v2293 = vadd.f32 %v2292, %v2268
      %v2294 = vadd.f32 %v2293, %v2270
      %v2295 = vadd.f32 %v2294, %v2272
      %v2296 = vadd.f32 %v2295, %v2274
      %v2297 = vadd.f32 %v2296, %v2276
      %v2298 = vadd.f32 %v2297, %v2278
      %v2299 = vadd.f32 %v2298, %v2280
      %v2300 = vadd.f32 %v2299, %v2282
      %v2301 = vadd.f32 %v2300, %v2284
      %v2302 = vadd.f32 %v2301, %v2286
      %v2303 = vadd.f32 %v2302, %v2288
      %v2304 = vrot.slane %v2303, 4
      %v2305 = vadd.f32 %v2303, %v2304
      %v2306 = vrot.slane %v2305, 2
      %v2307 = vadd.f32 %v2305, %v2306
      %v2308 = vrot.slane %v2307, 1
      %v2309 = vadd.f32 %v2307, %v2308
      %v2310 = vmul.f32 %v2309, 0.5
      %v2311 = vld [vmem:[#allocation9] sm:$0xff]
      %vm2312 = vcmp.eq.s32.totalorder %v1707, 1
      %vm2313 = vmand %vm1895, %vm2312
      %v2314 = vsel %vm2313, %v2310, 0.0
      %v2315 = vadd.f32 %v2311, %v2314
      %2316 = vst [vmem:[#allocation9] sm:$0xff] %v2315
    $region33: #{tpu_custom_call.1} parent=1 // pred_fallthru
      _
    // Predicated region
    $region34: #{tpu_custom_call.1} parent=1 // pred_check
      _
    $region35: #{tpu_custom_call.1} parent=1 // pred_check_branch
      %2318 = sbr.rel (0) target = $region37
    $region36: #{tpu_custom_call.1} parent=1 // pred_region
      %s2320 = ssub.s32 512, 512
      %2321 = vsyncadd [#allocation4], %s2320
      %s2323 = sshll.u32 [#allocation8], 4
      %s2324 = int_to_ptr.vmem [resolvable:$true] %s2323
      %2326 = dma.vmem_to_hbm [thread:$0]  %s2324, 512, %s4, [#allocation4]
    $region37: #{tpu_custom_call.1} parent=1 // pred_fallthru
      _
    // Predicated region
    $region38: #{tpu_custom_call.1} parent=1 // pred_check
      _
    $region39: #{tpu_custom_call.1} parent=1 // pred_check_branch
      %2328 = sbr.rel (0) target = $region41
    $region40: #{tpu_custom_call.1} parent=1 // pred_region
      %s2330 = ssub.s32 128, 128
      %2331 = vsyncadd [#allocation10], %s2330
      %s2333 = sshll.u32 [#allocation9], 4
      %s2334 = int_to_ptr.vmem [resolvable:$true] %s2333
      %2336 = dma.vmem_to_hbm [thread:$0]  %s2334, 128, %s5, [#allocation10]
    $region41: #{tpu_custom_call.1} parent=1 // pred_fallthru
      _
    // Predicated region
    $region42: #{tpu_custom_call.1} parent=1 // pred_check
      _
    $region43: #{tpu_custom_call.1} parent=1 // pred_check_branch
      %2338 = sbr.rel (0) target = $region45
    $region44: #{tpu_custom_call.1} parent=1 // pred_region
      %2339 = dma.done [#allocation4], 512
    $region45: #{tpu_custom_call.1} parent=1 // pred_fallthru
      _
    // Predicated region
    $region46: #{tpu_custom_call.1} parent=1 // pred_check
      _
    $region47: #{tpu_custom_call.1} parent=1 // pred_check_branch
      %2341 = sbr.rel (0) target = $region49
    $region48: #{tpu_custom_call.1} parent=1 // pred_region
      %2342 = dma.done [#allocation10], 128
    $region49: #{tpu_custom_call.1} parent=1 // pred_fallthru
      _
    %2343 = vsyncpa [#allocation3], 1
    %2344 = vsyncpa [#allocation6], 1
    %2345 = vsyncpa [#allocation4], 1
    %2346 = vsyncpa [#allocation10], 1

</llo_original>
